<compile_context>
chip_gen: v6e
topology: v6e:2x2x1
jax: 0.10.0
libtpu: 0.0.40
codegen_flags: <defaults>
</compile_context>

<pallas_src>
import functools
import math

import jax
import jax.numpy as jnp
from jax.experimental import pallas as pl
from jax.experimental.pallas import tpu as pltpu


# ----------------------------------------------------------------------------
# Pallas kernel: fused 3x3/stride-2 conv (space-to-depth form) + LeakyReLU(0.01)
# ----------------------------------------------------------------------------
def _conv_s2d_kernel(x_ref, w_ref, o_ref, *, tr, wo, kc):
    # x_ref: (tr+1, wo+1, kc) bf16   space-to-depth input rows for this tile
    #        x_ref[i, j, (a*2+b)*Cin + c] = xpad[2*(r0+i)+a, 2*j+b, c]
    # w_ref: (4, kc, Cout) bf16      parity-folded weights (zero-padded taps)
    # o_ref: (tr*wo, Cout) f32       conv + LeakyReLU output rows (flattened)
    acc = None
    for q in range(4):                       # q = i0*2 + j0, (i0, j0) in {0,1}^2
        i0, j0 = divmod(q, 2)
        xt = x_ref[i0:i0 + tr, j0:j0 + wo, :].reshape(tr * wo, kc)
        part = jnp.dot(xt, w_ref[q], preferred_element_type=jnp.float32)
        acc = part if acc is None else acc + part
    o_ref[...] = jnp.where(acc > 0, acc, 0.01 * acc).astype(o_ref.dtype)


def _fold_weight(w_hwio):
    """(3,3,Cin,Cout) HWIO -> (4, 4*Cin, Cout) parity-folded, zero-padded, bf16.

    w4[i0*2+j0, (a*2+b)*Cin + c, :] = W[2*i0+a, 2*j0+b, c, :]  (zero if kh/kw==3)
    matching the space-to-depth lane order of the kernel input.
    """
    cin, cout = w_hwio.shape[2], w_hwio.shape[3]
    w6 = jnp.zeros((2, 2, 2, 2, cin, cout), w_hwio.dtype)
    for i0 in range(2):
        for j0 in range(2):
            for a in range(2):
                for b in range(2):
                    kh, kw = 2 * i0 + a, 2 * j0 + b
                    if kh < 3 and kw < 3:
                        w6 = w6.at[i0, j0, a, b].set(w_hwio[kh, kw])
    return w6.reshape(4, 4 * cin, cout).astype(jnp.bfloat16)


def _choose_row_tile(ho, wo, kc, cout,
                     vmem_budget_bytes=40 * 2**20, target_rows=1024):
    """Pick TR output rows per grid step.

    TR is a multiple of m = 8 // gcd(wo, 8) so the (TR*wo, Cout) output block
    keeps its second-minor dim a multiple of 8, and is sized so the
    double-buffered tiles stay well inside v7x's 64 MiB VMEM.
    """
    m = 8 // math.gcd(wo, 8)
    wq = wo + 1

    def vmem_need(t):
        in_t = (t + 1) * wq * kc * 2           # bf16 input tile
        out_t = t * wo * cout * 4              # f32 output tile
        w_t = 4 * kc * cout * 2                # resident folded weight
        acc_t = t * wo * max(cout, 128) * 4    # f32 accumulator
        return 2 * (in_t + out_t) + w_t + acc_t

    tr = max(m, -(-target_rows // wo))
    tr = ((tr + m - 1) // m) * m
    tr = min(tr, ((ho + m - 1) // m) * m)      # no point tiling beyond Ho
    while tr > m and vmem_need(tr) > vmem_budget_bytes:
        tr -= m
    n_tiles = -(-ho // tr)
    return tr, n_tiles, vmem_need(tr)


# ----------------------------------------------------------------------------
# One 'CR' layer: Conv2d(3x3, s=2, p=1, bias=False) + LeakyReLU(0.01)
# ----------------------------------------------------------------------------
def conv_cr_layer(x_nhwc, w_hwio):
    """x_nhwc: (N,H,W,Cin) f32; w_hwio: (3,3,Cin,Cout) f32 -> (N,Ho,Wo,Cout) f32."""
    n, h, w, cin = x_nhwc.shape
    cout = w_hwio.shape[-1]
    ho = (h - 1) // 2 + 1
    wo = (w - 1) // 2 + 1
    kc = 4 * cin

    tr, n_tiles, need = _choose_row_tile(ho, wo, kc, cout)
    ho_grid = tr * n_tiles
    hq, wq = ho_grid + 1, wo + 1

    # -- glue (pure layout, in bf16): zero-pad + space-to-depth + row tiles ----
    xb = x_nhwc.astype(jnp.bfloat16)
    xpad = jnp.pad(xb, ((0, 0),
                        (1, 2 * hq - h - 1),
                        (1, 2 * wq - w - 1),
                        (0, 0)))
    # x_s2d[n, i, j, (a*2+b)*Cin + c] = xpad[n, 2i+a, 2j+b, c]
    x_s2d = (xpad.reshape(n, hq, 2, wq, 2, cin)
             .transpose(0, 1, 3, 2, 4, 5)
             .reshape(n, hq, wq, kc))
    x_main = x_s2d[:, :ho_grid].reshape(n, n_tiles, tr, wq, kc)
    x_halo = x_s2d[:, tr::tr][:, :, None]                 # (n, n_tiles, 1, wq, kc)
    x_tiles = jnp.concatenate([x_main, x_halo], axis=2)   # (n, n_tiles, tr+1, wq, kc)

    w4 = _fold_weight(w_hwio)                              # (4, kc, cout) bf16

    vmem_limit = int(min(48 * 2**20, max(16 * 2**20, 2 * need)))
    flops = 2 * n * ho * wo * 9 * cin * cout
    bytes_accessed = int(n * n_tiles * (tr + 1) * wq * kc * 2
                         + 4 * kc * cout * 2
                         + n * ho_grid * wo * cout * 4)

    out = pl.pallas_call(
        functools.partial(_conv_s2d_kernel, tr=tr, wo=wo, kc=kc),
        out_shape=jax.ShapeDtypeStruct((n, ho_grid * wo, cout), jnp.float32),
        grid=(n, n_tiles),
        in_specs=[
            pl.BlockSpec((None, None, tr + 1, wq, kc),
                         lambda b, i: (b, i, 0, 0, 0)),
            pl.BlockSpec((4, kc, cout), lambda b, i: (0, 0, 0)),
        ],
        out_specs=pl.BlockSpec((None, tr * wo, cout), lambda b, i: (b, i, 0)),
        compiler_params=pltpu.CompilerParams(
            dimension_semantics=("parallel", "parallel"),
            vmem_limit_bytes=vmem_limit),
        cost_estimate=pl.CostEstimate(flops=flops, transcendentals=0,
                                      bytes_accessed=bytes_accessed),
    )(x_tiles, w4)

    return out.reshape(n, ho_grid, wo, cout)[:, :ho]


# ----------------------------------------------------------------------------
# DownSequence forward (through=True): returns [x, y1, y2, ...] (NCHW, like torch)
# ----------------------------------------------------------------------------
def down_sequence_forward(x_nchw, weights, through=True):
    """x_nchw: (N,Cin,H,W) f32; weights: list of (3,3,ci,co) f32 arrays."""
    out = [x_nchw] if through else []
    x = jnp.transpose(x_nchw, (0, 2, 3, 1))          # one-time NCHW -> NHWC
    for w in weights:
        x = conv_cr_layer(x, w)                      # chain stays NHWC
        out.append(jnp.transpose(x, (0, 3, 1, 2)))   # single NCHW copy per output
    return out


def make_weights(key, in_channels, layer_channels):
    channels = [in_channels] + list(layer_channels)
    weights = []
    for i in range(len(channels) - 1):
        key, sub = jax.random.split(key)
        w = 0.1 * jax.random.normal(
            sub, (3, 3, channels[i], channels[i + 1]), dtype=jnp.float32)
        weights.append(w)
    return weights


# ----------------------------------------------------------------------------
# Reference (plain JAX, same bf16 operand quantization) for correctness check.
# ----------------------------------------------------------------------------
def _ref_layer(x_nhwc, w_hwio):
    y = jax.lax.conv_general_dilated(
        x_nhwc.astype(jnp.bfloat16), w_hwio.astype(jnp.bfloat16),
        window_strides=(2, 2), padding=((1, 1), (1, 1)),
        dimension_numbers=("NHWC", "HWIO", "NHWC"),
        preferred_element_type=jnp.float32)
    return jnp.where(y > 0, y, 0.01 * y)


def _ref_forward(x_nchw, weights):
    out = [x_nchw]
    x = jnp.transpose(x_nchw, (0, 2, 3, 1))
    for w in weights:
        x = _ref_layer(x, w)
        out.append(jnp.transpose(x, (0, 3, 1, 2)))
    return out


if __name__ == "__main__":
    key = jax.random.PRNGKey(0)
    k_x, k_w = jax.random.split(key)

    # Small deterministic example: NCHW input, matching the PyTorch module.
    n, cin, h, wd = 2, 4, 16, 16
    layer_channels = [8, 16, 16]
    x = jax.random.normal(k_x, (n, cin, h, wd), dtype=jnp.float32)
    weights = make_weights(k_w, cin, layer_channels)

    fwd = jax.jit(down_sequence_forward)
    outs = fwd(x, weights)
    outs = [jax.block_until_ready(o) for o in outs]

    # Sanity-check against a plain-JAX reference conv (same bf16 operands).
    refs = _ref_forward(x, weights)
    assert len(outs) == len(layer_channels) + 1
    for o, r in zip(outs, refs):
        assert o.shape == r.shape and o.dtype == r.dtype
        assert bool(jnp.allclose(o, r, atol=1e-2, rtol=1e-2))

    print("KERNEL_OK")
</pallas_src>

<mosaic_0001>
module attributes {stable_mosaic.version = 11 : i64} {
  func.func @_conv_s2d_kernel(%arg0: i32, %arg1: i32, %arg2: memref<1x1x9x9x16xbf16, #tpu.memory_space<vmem>>, %arg3: memref<4x16x8xbf16, #tpu.memory_space<vmem>>, %arg4: memref<1x64x8xf32, #tpu.memory_space<vmem>>) attributes {dimension_semantics = [#tpu.dimension_semantics<parallel>, #tpu.dimension_semantics<parallel>], iteration_bounds = array<i64: 2, 1>, scalar_prefetch = 0 : i64, scratch_operands = 0 : i64, tpu.core_type = #tpu.core_type<tc>, window_params = [{transform_indices = @transform_0, window_bounds = array<i64: 1, 1, 9, 9, 16>}, {pipeline_mode = #tpu.pipeline_mode<synchronous>, transform_indices = @transform_1, window_bounds = array<i64: 4, 16, 8>}, {transform_indices = @transform_2, window_bounds = array<i64: 1, 64, 8>}]} {
    %c0 = arith.constant 0 : index
    %c0_0 = arith.constant 0 : index
    %c0_1 = arith.constant 0 : index
    %c0_2 = arith.constant 0 : index
    %c0_3 = arith.constant 0 : index
    %0 = vector.load %arg2[%c0, %c0_0, %c0_1, %c0_2, %c0_3] : memref<1x1x9x9x16xbf16, #tpu.memory_space<vmem>>, vector<1x1x8x8x16xbf16>
    %1 = vector.shape_cast %0 : vector<1x1x8x8x16xbf16> to vector<8x8x16xbf16>
    %2 = vector.shape_cast %1 : vector<8x8x16xbf16> to vector<64x16xbf16>
    %c0_4 = arith.constant 0 : index
    %c0_5 = arith.constant 0 : index
    %c0_6 = arith.constant 0 : index
    %3 = vector.load %arg3[%c0_4, %c0_5, %c0_6] : memref<4x16x8xbf16, #tpu.memory_space<vmem>>, vector<1x16x8xbf16>
    %4 = vector.shape_cast %3 : vector<1x16x8xbf16> to vector<16x8xbf16>
    %cst = arith.constant dense<0.000000e+00> : vector<64x8xf32>
    %5 = tpu.matmul %2, %4, %cst {dimension_numbers = #tpu.dot_dimension_numbers<[1], [0], [0], [1], [0, 0, 1, 1], [], []>} : vector<64x16xbf16>, vector<16x8xbf16>, vector<64x8xf32> -> vector<64x8xf32>
    %c0_7 = arith.constant 0 : index
    %c0_8 = arith.constant 0 : index
    %c0_9 = arith.constant 0 : index
    %c1 = arith.constant 1 : index
    %c0_10 = arith.constant 0 : index
    %6 = vector.load %arg2[%c0_7, %c0_8, %c0_9, %c1, %c0_10] : memref<1x1x9x9x16xbf16, #tpu.memory_space<vmem>>, vector<1x1x8x8x16xbf16>
    %7 = vector.shape_cast %6 : vector<1x1x8x8x16xbf16> to vector<8x8x16xbf16>
    %8 = vector.shape_cast %7 : vector<8x8x16xbf16> to vector<64x16xbf16>
    %c1_11 = arith.constant 1 : index
    %c0_12 = arith.constant 0 : index
    %c0_13 = arith.constant 0 : index
    %9 = vector.load %arg3[%c1_11, %c0_12, %c0_13] : memref<4x16x8xbf16, #tpu.memory_space<vmem>>, vector<1x16x8xbf16>
    %10 = vector.shape_cast %9 : vector<1x16x8xbf16> to vector<16x8xbf16>
    %cst_14 = arith.constant dense<0.000000e+00> : vector<64x8xf32>
    %11 = tpu.matmul %8, %10, %cst_14 {dimension_numbers = #tpu.dot_dimension_numbers<[1], [0], [0], [1], [0, 0, 1, 1], [], []>} : vector<64x16xbf16>, vector<16x8xbf16>, vector<64x8xf32> -> vector<64x8xf32>
    %12 = arith.addf %5, %11 : vector<64x8xf32>
    %c0_15 = arith.constant 0 : index
    %c0_16 = arith.constant 0 : index
    %c1_17 = arith.constant 1 : index
    %c0_18 = arith.constant 0 : index
    %c0_19 = arith.constant 0 : index
    %13 = vector.load %arg2[%c0_15, %c0_16, %c1_17, %c0_18, %c0_19] : memref<1x1x9x9x16xbf16, #tpu.memory_space<vmem>>, vector<1x1x8x8x16xbf16>
    %14 = vector.shape_cast %13 : vector<1x1x8x8x16xbf16> to vector<8x8x16xbf16>
    %15 = vector.shape_cast %14 : vector<8x8x16xbf16> to vector<64x16xbf16>
    %c2 = arith.constant 2 : index
    %c0_20 = arith.constant 0 : index
    %c0_21 = arith.constant 0 : index
    %16 = vector.load %arg3[%c2, %c0_20, %c0_21] : memref<4x16x8xbf16, #tpu.memory_space<vmem>>, vector<1x16x8xbf16>
    %17 = vector.shape_cast %16 : vector<1x16x8xbf16> to vector<16x8xbf16>
    %cst_22 = arith.constant dense<0.000000e+00> : vector<64x8xf32>
    %18 = tpu.matmul %15, %17, %cst_22 {dimension_numbers = #tpu.dot_dimension_numbers<[1], [0], [0], [1], [0, 0, 1, 1], [], []>} : vector<64x16xbf16>, vector<16x8xbf16>, vector<64x8xf32> -> vector<64x8xf32>
    %19 = arith.addf %12, %18 : vector<64x8xf32>
    %c0_23 = arith.constant 0 : index
    %c0_24 = arith.constant 0 : index
    %c1_25 = arith.constant 1 : index
    %c1_26 = arith.constant 1 : index
    %c0_27 = arith.constant 0 : index
    %20 = vector.load %arg2[%c0_23, %c0_24, %c1_25, %c1_26, %c0_27] : memref<1x1x9x9x16xbf16, #tpu.memory_space<vmem>>, vector<1x1x8x8x16xbf16>
    %21 = vector.shape_cast %20 : vector<1x1x8x8x16xbf16> to vector<8x8x16xbf16>
    %22 = vector.shape_cast %21 : vector<8x8x16xbf16> to vector<64x16xbf16>
    %c3 = arith.constant 3 : index
    %c0_28 = arith.constant 0 : index
    %c0_29 = arith.constant 0 : index
    %23 = vector.load %arg3[%c3, %c0_28, %c0_29] : memref<4x16x8xbf16, #tpu.memory_space<vmem>>, vector<1x16x8xbf16>
    %24 = vector.shape_cast %23 : vector<1x16x8xbf16> to vector<16x8xbf16>
    %cst_30 = arith.constant dense<0.000000e+00> : vector<64x8xf32>
    %25 = tpu.matmul %22, %24, %cst_30 {dimension_numbers = #tpu.dot_dimension_numbers<[1], [0], [0], [1], [0, 0, 1, 1], [], []>} : vector<64x16xbf16>, vector<16x8xbf16>, vector<64x8xf32> -> vector<64x8xf32>
    %26 = arith.addf %19, %25 : vector<64x8xf32>
    %cst_31 = arith.constant 0.000000e+00 : f32
    %27 = vector.broadcast %cst_31 : f32 to vector<64x8xf32>
    %28 = arith.cmpf ogt, %26, %27 : vector<64x8xf32>
    %cst_32 = arith.constant 0.00999999977 : f32
    %29 = vector.broadcast %cst_32 : f32 to vector<64x8xf32>
    %30 = arith.mulf %29, %26 : vector<64x8xf32>
    %31 = arith.select %28, %26, %30 : vector<64x8xi1>, vector<64x8xf32>
    %c0_33 = arith.constant 0 : index
    %c0_34 = arith.constant 0 : index
    %c0_35 = arith.constant 0 : index
    %32 = vector.load %arg4[%c0_33, %c0_34, %c0_35] : memref<1x64x8xf32, #tpu.memory_space<vmem>>, vector<1x64x8xf32>
    %33 = vector.shape_cast %32 : vector<1x64x8xf32> to vector<64x8xf32>
    %34 = vector.shape_cast %31 : vector<64x8xf32> to vector<1x64x8xf32>
    tpu.vector_store %arg4[%c0_33, %c0_34, %c0_35], %34 {strides = array<i32>} : memref<1x64x8xf32, #tpu.memory_space<vmem>>, vector<1x64x8xf32>,
    return
  }
  func.func @transform_0(%arg0: i32, %arg1: i32) -> (i32, i32, i32, i32, i32) {
    %c0_i32 = arith.constant 0 : i32
    %c0_i32_0 = arith.constant 0 : i32
    %c0_i32_1 = arith.constant 0 : i32
    %c0_i32_2 = arith.constant 0 : i32
    return %arg0, %arg1, %c0_i32, %c0_i32_0, %c0_i32_1 : i32, i32, i32, i32, i32
  }
  func.func @transform_1(%arg0: i32, %arg1: i32) -> (i32, i32, i32) {
    %c0_i32 = arith.constant 0 : i32
    %c0_i32_0 = arith.constant 0 : i32
    %c0_i32_1 = arith.constant 0 : i32
    %c0_i32_2 = arith.constant 0 : i32
    return %c0_i32, %c0_i32_0, %c0_i32_1 : i32, i32, i32
  }
  func.func @transform_2(%arg0: i32, %arg1: i32) -> (i32, i32, i32) {
    %c0_i32 = arith.constant 0 : i32
    %c0_i32_0 = arith.constant 0 : i32
    return %arg0, %arg1, %c0_i32 : i32, i32, i32
  }
}

module attributes {stable_mosaic.version = 11 : i64} {
  func.func @_conv_s2d_kernel(%arg0: i32, %arg1: i32, %arg2: memref<1x1x5x5x32xbf16, #tpu.memory_space<vmem>>, %arg3: memref<4x32x16xbf16, #tpu.memory_space<vmem>>, %arg4: memref<1x16x16xf32, #tpu.memory_space<vmem>>) attributes {dimension_semantics = [#tpu.dimension_semantics<parallel>, #tpu.dimension_semantics<parallel>], iteration_bounds = array<i64: 2, 1>, scalar_prefetch = 0 : i64, scratch_operands = 0 : i64, tpu.core_type = #tpu.core_type<tc>, window_params = [{transform_indices = @transform_0, window_bounds = array<i64: 1, 1, 5, 5, 32>}, {pipeline_mode = #tpu.pipeline_mode<synchronous>, transform_indices = @transform_1, window_bounds = array<i64: 4, 32, 16>}, {transform_indices = @transform_2, window_bounds = array<i64: 1, 16, 16>}]} {
    %c0 = arith.constant 0 : index
    %c0_0 = arith.constant 0 : index
    %c0_1 = arith.constant 0 : index
    %c0_2 = arith.constant 0 : index
    %c0_3 = arith.constant 0 : index
    %0 = vector.load %arg2[%c0, %c0_0, %c0_1, %c0_2, %c0_3] : memref<1x1x5x5x32xbf16, #tpu.memory_space<vmem>>, vector<1x1x4x4x32xbf16>
    %1 = vector.shape_cast %0 : vector<1x1x4x4x32xbf16> to vector<4x4x32xbf16>
    %2 = vector.shape_cast %1 : vector<4x4x32xbf16> to vector<16x32xbf16>
    %c0_4 = arith.constant 0 : index
    %c0_5 = arith.constant 0 : index
    %c0_6 = arith.constant 0 : index
    %3 = vector.load %arg3[%c0_4, %c0_5, %c0_6] : memref<4x32x16xbf16, #tpu.memory_space<vmem>>, vector<1x32x16xbf16>
    %4 = vector.shape_cast %3 : vector<1x32x16xbf16> to vector<32x16xbf16>
    %cst = arith.constant dense<0.000000e+00> : vector<16x16xf32>
    %5 = tpu.matmul %2, %4, %cst {dimension_numbers = #tpu.dot_dimension_numbers<[1], [0], [0], [1], [0, 0, 1, 1], [], []>} : vector<16x32xbf16>, vector<32x16xbf16>, vector<16x16xf32> -> vector<16x16xf32>
    %c0_7 = arith.constant 0 : index
    %c0_8 = arith.constant 0 : index
    %c0_9 = arith.constant 0 : index
    %c1 = arith.constant 1 : index
    %c0_10 = arith.constant 0 : index
    %6 = vector.load %arg2[%c0_7, %c0_8, %c0_9, %c1, %c0_10] : memref<1x1x5x5x32xbf16, #tpu.memory_space<vmem>>, vector<1x1x4x4x32xbf16>
    %7 = vector.shape_cast %6 : vector<1x1x4x4x32xbf16> to vector<4x4x32xbf16>
    %8 = vector.shape_cast %7 : vector<4x4x32xbf16> to vector<16x32xbf16>
    %c1_11 = arith.constant 1 : index
    %c0_12 = arith.constant 0 : index
    %c0_13 = arith.constant 0 : index
    %9 = vector.load %arg3[%c1_11, %c0_12, %c0_13] : memref<4x32x16xbf16, #tpu.memory_space<vmem>>, vector<1x32x16xbf16>
    %10 = vector.shape_cast %9 : vector<1x32x16xbf16> to vector<32x16xbf16>
    %cst_14 = arith.constant dense<0.000000e+00> : vector<16x16xf32>
    %11 = tpu.matmul %8, %10, %cst_14 {dimension_numbers = #tpu.dot_dimension_numbers<[1], [0], [0], [1], [0, 0, 1, 1], [], []>} : vector<16x32xbf16>, vector<32x16xbf16>, vector<16x16xf32> -> vector<16x16xf32>
    %12 = arith.addf %5, %11 : vector<16x16xf32>
    %c0_15 = arith.constant 0 : index
    %c0_16 = arith.constant 0 : index
    %c1_17 = arith.constant 1 : index
    %c0_18 = arith.constant 0 : index
    %c0_19 = arith.constant 0 : index
    %13 = vector.load %arg2[%c0_15, %c0_16, %c1_17, %c0_18, %c0_19] : memref<1x1x5x5x32xbf16, #tpu.memory_space<vmem>>, vector<1x1x4x4x32xbf16>
    %14 = vector.shape_cast %13 : vector<1x1x4x4x32xbf16> to vector<4x4x32xbf16>
    %15 = vector.shape_cast %14 : vector<4x4x32xbf16> to vector<16x32xbf16>
    %c2 = arith.constant 2 : index
    %c0_20 = arith.constant 0 : index
    %c0_21 = arith.constant 0 : index
    %16 = vector.load %arg3[%c2, %c0_20, %c0_21] : memref<4x32x16xbf16, #tpu.memory_space<vmem>>, vector<1x32x16xbf16>
    %17 = vector.shape_cast %16 : vector<1x32x16xbf16> to vector<32x16xbf16>
    %cst_22 = arith.constant dense<0.000000e+00> : vector<16x16xf32>
    %18 = tpu.matmul %15, %17, %cst_22 {dimension_numbers = #tpu.dot_dimension_numbers<[1], [0], [0], [1], [0, 0, 1, 1], [], []>} : vector<16x32xbf16>, vector<32x16xbf16>, vector<16x16xf32> -> vector<16x16xf32>
    %19 = arith.addf %12, %18 : vector<16x16xf32>
    %c0_23 = arith.constant 0 : index
    %c0_24 = arith.constant 0 : index
    %c1_25 = arith.constant 1 : index
    %c1_26 = arith.constant 1 : index
    %c0_27 = arith.constant 0 : index
    %20 = vector.load %arg2[%c0_23, %c0_24, %c1_25, %c1_26, %c0_27] : memref<1x1x5x5x32xbf16, #tpu.memory_space<vmem>>, vector<1x1x4x4x32xbf16>
    %21 = vector.shape_cast %20 : vector<1x1x4x4x32xbf16> to vector<4x4x32xbf16>
    %22 = vector.shape_cast %21 : vector<4x4x32xbf16> to vector<16x32xbf16>
    %c3 = arith.constant 3 : index
    %c0_28 = arith.constant 0 : index
    %c0_29 = arith.constant 0 : index
    %23 = vector.load %arg3[%c3, %c0_28, %c0_29] : memref<4x32x16xbf16, #tpu.memory_space<vmem>>, vector<1x32x16xbf16>
    %24 = vector.shape_cast %23 : vector<1x32x16xbf16> to vector<32x16xbf16>
    %cst_30 = arith.constant dense<0.000000e+00> : vector<16x16xf32>
    %25 = tpu.matmul %22, %24, %cst_30 {dimension_numbers = #tpu.dot_dimension_numbers<[1], [0], [0], [1], [0, 0, 1, 1], [], []>} : vector<16x32xbf16>, vector<32x16xbf16>, vector<16x16xf32> -> vector<16x16xf32>
    %26 = arith.addf %19, %25 : vector<16x16xf32>
    %cst_31 = arith.constant 0.000000e+00 : f32
    %27 = vector.broadcast %cst_31 : f32 to vector<16x16xf32>
    %28 = arith.cmpf ogt, %26, %27 : vector<16x16xf32>
    %cst_32 = arith.constant 0.00999999977 : f32
    %29 = vector.broadcast %cst_32 : f32 to vector<16x16xf32>
    %30 = arith.mulf %29, %26 : vector<16x16xf32>
    %31 = arith.select %28, %26, %30 : vector<16x16xi1>, vector<16x16xf32>
    %c0_33 = arith.constant 0 : index
    %c0_34 = arith.constant 0 : index
    %c0_35 = arith.constant 0 : index
    %32 = vector.load %arg4[%c0_33, %c0_34, %c0_35] : memref<1x16x16xf32, #tpu.memory_space<vmem>>, vector<1x16x16xf32>
    %33 = vector.shape_cast %32 : vector<1x16x16xf32> to vector<16x16xf32>
    %34 = vector.shape_cast %31 : vector<16x16xf32> to vector<1x16x16xf32>
    tpu.vector_store %arg4[%c0_33, %c0_34, %c0_35], %34 {strides = array<i32>} : memref<1x16x16xf32, #tpu.memory_space<vmem>>, vector<1x16x16xf32>,
    return
  }
  func.func @transform_0(%arg0: i32, %arg1: i32) -> (i32, i32, i32, i32, i32) {
    %c0_i32 = arith.constant 0 : i32
    %c0_i32_0 = arith.constant 0 : i32
    %c0_i32_1 = arith.constant 0 : i32
    %c0_i32_2 = arith.constant 0 : i32
    return %arg0, %arg1, %c0_i32, %c0_i32_0, %c0_i32_1 : i32, i32, i32, i32, i32
  }
  func.func @transform_1(%arg0: i32, %arg1: i32) -> (i32, i32, i32) {
    %c0_i32 = arith.constant 0 : i32
    %c0_i32_0 = arith.constant 0 : i32
    %c0_i32_1 = arith.constant 0 : i32
    %c0_i32_2 = arith.constant 0 : i32
    return %c0_i32, %c0_i32_0, %c0_i32_1 : i32, i32, i32
  }
  func.func @transform_2(%arg0: i32, %arg1: i32) -> (i32, i32, i32) {
    %c0_i32 = arith.constant 0 : i32
    %c0_i32_0 = arith.constant 0 : i32
    return %arg0, %arg1, %c0_i32 : i32, i32, i32
  }
}

module attributes {stable_mosaic.version = 11 : i64} {
  func.func @_conv_s2d_kernel(%arg0: i32, %arg1: i32, %arg2: memref<1x1x5x3x64xbf16, #tpu.memory_space<vmem>>, %arg3: memref<4x64x16xbf16, #tpu.memory_space<vmem>>, %arg4: memref<1x8x16xf32, #tpu.memory_space<vmem>>) attributes {dimension_semantics = [#tpu.dimension_semantics<parallel>, #tpu.dimension_semantics<parallel>], iteration_bounds = array<i64: 2, 1>, scalar_prefetch = 0 : i64, scratch_operands = 0 : i64, tpu.core_type = #tpu.core_type<tc>, window_params = [{transform_indices = @transform_0, window_bounds = array<i64: 1, 1, 5, 3, 64>}, {pipeline_mode = #tpu.pipeline_mode<synchronous>, transform_indices = @transform_1, window_bounds = array<i64: 4, 64, 16>}, {transform_indices = @transform_2, window_bounds = array<i64: 1, 8, 16>}]} {
    %c0 = arith.constant 0 : index
    %c0_0 = arith.constant 0 : index
    %c0_1 = arith.constant 0 : index
    %c0_2 = arith.constant 0 : index
    %c0_3 = arith.constant 0 : index
    %0 = vector.load %arg2[%c0, %c0_0, %c0_1, %c0_2, %c0_3] : memref<1x1x5x3x64xbf16, #tpu.memory_space<vmem>>, vector<1x1x4x2x64xbf16>
    %1 = vector.shape_cast %0 : vector<1x1x4x2x64xbf16> to vector<4x2x64xbf16>
    %2 = vector.shape_cast %1 : vector<4x2x64xbf16> to vector<8x64xbf16>
    %c0_4 = arith.constant 0 : index
    %c0_5 = arith.constant 0 : index
    %c0_6 = arith.constant 0 : index
    %3 = vector.load %arg3[%c0_4, %c0_5, %c0_6] : memref<4x64x16xbf16, #tpu.memory_space<vmem>>, vector<1x64x16xbf16>
    %4 = vector.shape_cast %3 : vector<1x64x16xbf16> to vector<64x16xbf16>
    %cst = arith.constant dense<0.000000e+00> : vector<8x16xf32>
    %5 = tpu.matmul %2, %4, %cst {dimension_numbers = #tpu.dot_dimension_numbers<[1], [0], [0], [1], [0, 0, 1, 1], [], []>} : vector<8x64xbf16>, vector<64x16xbf16>, vector<8x16xf32> -> vector<8x16xf32>
    %c0_7 = arith.constant 0 : index
    %c0_8 = arith.constant 0 : index
    %c0_9 = arith.constant 0 : index
    %c1 = arith.constant 1 : index
    %c0_10 = arith.constant 0 : index
    %6 = vector.load %arg2[%c0_7, %c0_8, %c0_9, %c1, %c0_10] : memref<1x1x5x3x64xbf16, #tpu.memory_space<vmem>>, vector<1x1x4x2x64xbf16>
    %7 = vector.shape_cast %6 : vector<1x1x4x2x64xbf16> to vector<4x2x64xbf16>
    %8 = vector.shape_cast %7 : vector<4x2x64xbf16> to vector<8x64xbf16>
    %c1_11 = arith.constant 1 : index
    %c0_12 = arith.constant 0 : index
    %c0_13 = arith.constant 0 : index
    %9 = vector.load %arg3[%c1_11, %c0_12, %c0_13] : memref<4x64x16xbf16, #tpu.memory_space<vmem>>, vector<1x64x16xbf16>
    %10 = vector.shape_cast %9 : vector<1x64x16xbf16> to vector<64x16xbf16>
    %cst_14 = arith.constant dense<0.000000e+00> : vector<8x16xf32>
    %11 = tpu.matmul %8, %10, %cst_14 {dimension_numbers = #tpu.dot_dimension_numbers<[1], [0], [0], [1], [0, 0, 1, 1], [], []>} : vector<8x64xbf16>, vector<64x16xbf16>, vector<8x16xf32> -> vector<8x16xf32>
    %12 = arith.addf %5, %11 : vector<8x16xf32>
    %c0_15 = arith.constant 0 : index
    %c0_16 = arith.constant 0 : index
    %c1_17 = arith.constant 1 : index
    %c0_18 = arith.constant 0 : index
    %c0_19 = arith.constant 0 : index
    %13 = vector.load %arg2[%c0_15, %c0_16, %c1_17, %c0_18, %c0_19] : memref<1x1x5x3x64xbf16, #tpu.memory_space<vmem>>, vector<1x1x4x2x64xbf16>
    %14 = vector.shape_cast %13 : vector<1x1x4x2x64xbf16> to vector<4x2x64xbf16>
    %15 = vector.shape_cast %14 : vector<4x2x64xbf16> to vector<8x64xbf16>
    %c2 = arith.constant 2 : index
    %c0_20 = arith.constant 0 : index
    %c0_21 = arith.constant 0 : index
    %16 = vector.load %arg3[%c2, %c0_20, %c0_21] : memref<4x64x16xbf16, #tpu.memory_space<vmem>>, vector<1x64x16xbf16>
    %17 = vector.shape_cast %16 : vector<1x64x16xbf16> to vector<64x16xbf16>
    %cst_22 = arith.constant dense<0.000000e+00> : vector<8x16xf32>
    %18 = tpu.matmul %15, %17, %cst_22 {dimension_numbers = #tpu.dot_dimension_numbers<[1], [0], [0], [1], [0, 0, 1, 1], [], []>} : vector<8x64xbf16>, vector<64x16xbf16>, vector<8x16xf32> -> vector<8x16xf32>
    %19 = arith.addf %12, %18 : vector<8x16xf32>
    %c0_23 = arith.constant 0 : index
    %c0_24 = arith.constant 0 : index
    %c1_25 = arith.constant 1 : index
    %c1_26 = arith.constant 1 : index
    %c0_27 = arith.constant 0 : index
    %20 = vector.load %arg2[%c0_23, %c0_24, %c1_25, %c1_26, %c0_27] : memref<1x1x5x3x64xbf16, #tpu.memory_space<vmem>>, vector<1x1x4x2x64xbf16>
    %21 = vector.shape_cast %20 : vector<1x1x4x2x64xbf16> to vector<4x2x64xbf16>
    %22 = vector.shape_cast %21 : vector<4x2x64xbf16> to vector<8x64xbf16>
    %c3 = arith.constant 3 : index
    %c0_28 = arith.constant 0 : index
    %c0_29 = arith.constant 0 : index
    %23 = vector.load %arg3[%c3, %c0_28, %c0_29] : memref<4x64x16xbf16, #tpu.memory_space<vmem>>, vector<1x64x16xbf16>
    %24 = vector.shape_cast %23 : vector<1x64x16xbf16> to vector<64x16xbf16>
    %cst_30 = arith.constant dense<0.000000e+00> : vector<8x16xf32>
    %25 = tpu.matmul %22, %24, %cst_30 {dimension_numbers = #tpu.dot_dimension_numbers<[1], [0], [0], [1], [0, 0, 1, 1], [], []>} : vector<8x64xbf16>, vector<64x16xbf16>, vector<8x16xf32> -> vector<8x16xf32>
    %26 = arith.addf %19, %25 : vector<8x16xf32>
    %cst_31 = arith.constant 0.000000e+00 : f32
    %27 = vector.broadcast %cst_31 : f32 to vector<8x16xf32>
    %28 = arith.cmpf ogt, %26, %27 : vector<8x16xf32>
    %cst_32 = arith.constant 0.00999999977 : f32
    %29 = vector.broadcast %cst_32 : f32 to vector<8x16xf32>
    %30 = arith.mulf %29, %26 : vector<8x16xf32>
    %31 = arith.select %28, %26, %30 : vector<8x16xi1>, vector<8x16xf32>
    %c0_33 = arith.constant 0 : index
    %c0_34 = arith.constant 0 : index
    %c0_35 = arith.constant 0 : index
    %32 = vector.load %arg4[%c0_33, %c0_34, %c0_35] : memref<1x8x16xf32, #tpu.memory_space<vmem>>, vector<1x8x16xf32>
    %33 = vector.shape_cast %32 : vector<1x8x16xf32> to vector<8x16xf32>
    %34 = vector.shape_cast %31 : vector<8x16xf32> to vector<1x8x16xf32>
    tpu.vector_store %arg4[%c0_33, %c0_34, %c0_35], %34 {strides = array<i32>} : memref<1x8x16xf32, #tpu.memory_space<vmem>>, vector<1x8x16xf32>,
    return
  }
  func.func @transform_0(%arg0: i32, %arg1: i32) -> (i32, i32, i32, i32, i32) {
    %c0_i32 = arith.constant 0 : i32
    %c0_i32_0 = arith.constant 0 : i32
    %c0_i32_1 = arith.constant 0 : i32
    %c0_i32_2 = arith.constant 0 : i32
    return %arg0, %arg1, %c0_i32, %c0_i32_0, %c0_i32_1 : i32, i32, i32, i32, i32
  }
  func.func @transform_1(%arg0: i32, %arg1: i32) -> (i32, i32, i32) {
    %c0_i32 = arith.constant 0 : i32
    %c0_i32_0 = arith.constant 0 : i32
    %c0_i32_1 = arith.constant 0 : i32
    %c0_i32_2 = arith.constant 0 : i32
    return %c0_i32, %c0_i32_0, %c0_i32_1 : i32, i32, i32
  }
  func.func @transform_2(%arg0: i32, %arg1: i32) -> (i32, i32, i32) {
    %c0_i32 = arith.constant 0 : i32
    %c0_i32_0 = arith.constant 0 : i32
    return %arg0, %arg1, %c0_i32 : i32, i32, i32
  }
}

</mosaic_0001>

<llo_original>
// kernel: down_sequence_forward.3
$region0: #{down_sequence_forward.3}
  #allocation0 [shape = 'u32[]', space=smem, size = 0x4, offset = 0x4, fixed_abs, tag = 'smem constant byte address 0x4 - core index']
  #allocation1 [shape = 'u32[144,128]{1,0:T(1,128)}', space=vmem, size = 0x12000, scoped, tag = 'internal scratch']
  %s0 = inlined_call_operand.vmem [shape: bf16[2,1,9,9,16], index: 0, kind: input, shape index: {}]
  %s1 = inlined_call_operand.vmem [shape: bf16[4,16,8], index: 1, kind: input, shape index: {}]
  %s2 = inlined_call_operand.vmem [shape: f32[2,64,8], index: 2, kind: output, shape index: {}]
  %s3 = sld [smem:[#allocation0]]
  $region41: #{down_sequence_forward.3} parent=0
    _
  %s5 = ssub.s32 1, %s3
  %s6 = scalar_select 0, %s5, %s3
  loop: start=0, step=1, limit=4
  $region2: #{down_sequence_forward.3} parent=0 // loop_pre_header
    _
  $region3: #{down_sequence_forward.3} parent=0 // loop_header
    %s8 = sphi 0, %s12
    %p9 = scmp.ge.s32.totalorder %s8, 4
    %s15 = sphi 0, %s27
    %s16 = sphi 0, %s23
    %s17 = sphi 0, %s15
    %s18 = sphi 0, %s16
    %s19 = sphi 0, %s17
    %s20 = sphi 0, %s18
    %s32 = sphi 0, %s34
    %s35 = sphi 0, %s32
    %s36 = sphi 0, %s35
    %s52 = sphi 0, %s36
    %s56 = sphi 0, %s56
    %s58 = sphi 0, %s56
    %s59 = sphi 0, %s58
    %s73 = sphi 0, %s59
    %s81 = sphi 0, %s83
    %s84 = sphi 0, %s81
    %s85 = sphi 0, %s84
    %s101 = sphi 0, %s85
  $region4: #{down_sequence_forward.3} parent=0 // loop_header_branch
    %11 = sbr.rel (%p9) target = $region8
  $region5: #{down_sequence_forward.3} parent=0 // loop_body
    %s13 = ssub.s32 %s8, 1
    %s14 = ssub.s32 %s8, 2
    %s21 = sadd.s32 1, %s16
    %p22 = scmp.ge.s32.totalorder %s21, 1
    %s23 = scalar_select %p22, 0, %s21
    %s24 = sadd.s32 1, %s15
    %s25 = scalar_select %p22, %s24, %s15
    %p26 = scmp.ge.s32.totalorder %s25, 2
    %s27 = scalar_select %p26, 0, %s25
    %s28 = ssub.s32 %s15, %s27
    %s29 = ssub.s32 %s16, %s23
    %s30 = sor.u32 %s28, %s29
    %p31 = scmp.eq.s32.totalorder %s30, 0
    %s33 = sadd.s32 %s32, 1
    %s34 = scalar_select %p31, %s32, %s33
    %p37 = pneg %p31
    %p38 = scmp.eq.s32.totalorder %s8, 1
    %p39 = por %p37, %p38
    %p40 = scmp.ne.s32.totalorder %s32, %s35
    %p41 = scmp.eq.s32.totalorder %s8, 0
    %p42 = por %p40, %p41
    %p43 = scmp.ne.s32.totalorder %s32, %s35
    %p44 = scmp.eq.s32.totalorder %s13, 1
    %p45 = por %p43, %p44
    %p46 = scmp.ne.s32.totalorder %s35, %s36
    %p47 = scmp.eq.s32.totalorder %s13, 0
    %p48 = por %p46, %p47
    %p49 = scmp.ne.s32.totalorder %s35, %s36
    %p50 = scmp.eq.s32.totalorder %s14, 1
    %p51 = por %p49, %p50
    %p53 = scmp.ne.s32.totalorder %s36, %s52
    %p54 = scmp.eq.s32.totalorder %s14, 0
    %p55 = por %p53, %p54
    %s57 = sadd.s32 %s56, 1
    %p60 = scmp.eq.s32.totalorder %s8, 1
    %p61 = scmp.ne.s32.totalorder %s56, %s58
    %p62 = scmp.eq.s32.totalorder %s8, 0
    %p63 = por %p61, %p62
    %p64 = scmp.ne.s32.totalorder %s56, %s58
    %p65 = scmp.eq.s32.totalorder %s13, 1
    %p66 = por %p64, %p65
    %p67 = scmp.ne.s32.totalorder %s58, %s59
    %p68 = scmp.eq.s32.totalorder %s13, 0
    %p69 = por %p67, %p68
    %p70 = scmp.ne.s32.totalorder %s58, %s59
    %p71 = scmp.eq.s32.totalorder %s14, 1
    %p72 = por %p70, %p71
    %p74 = scmp.ne.s32.totalorder %s59, %s73
    %p75 = scmp.eq.s32.totalorder %s14, 0
    %p76 = por %p74, %p75
    %s77 = ssub.s32 %s15, %s27
    %s78 = ssub.s32 %s16, %s23
    %s79 = sor.u32 %s77, %s78
    %p80 = scmp.eq.s32.totalorder %s79, 0
    %s82 = sadd.s32 %s81, 1
    %s83 = scalar_select %p80, %s81, %s82
    %p86 = pneg %p80
    %p87 = scmp.eq.s32.totalorder %s8, 1
    %p88 = por %p86, %p87
    %p89 = scmp.ne.s32.totalorder %s81, %s84
    %p90 = scmp.eq.s32.totalorder %s8, 0
    %p91 = por %p89, %p90
    %p92 = scmp.ne.s32.totalorder %s81, %s84
    %p93 = scmp.eq.s32.totalorder %s13, 1
    %p94 = por %p92, %p93
    %p95 = scmp.ne.s32.totalorder %s84, %s85
    %p96 = scmp.eq.s32.totalorder %s13, 0
    %p97 = por %p95, %p96
    %p98 = scmp.ne.s32.totalorder %s84, %s85
    %p99 = scmp.eq.s32.totalorder %s14, 1
    %p100 = por %p98, %p99
    %p102 = scmp.ne.s32.totalorder %s85, %s101
    %p103 = scmp.eq.s32.totalorder %s14, 0
    %p104 = por %p102, %p103
    %p105 = scmp.le.s32.totalorder 1, %s8
    %p106 = scmp.lt.s32.totalorder %s8, 3
    %p107 = pnand %p105, %p106
    %p108 = pneg %p107
    // Predicated region
    $region9: #{down_sequence_forward.3} parent=5 // pred_check
      _
    $region10: #{down_sequence_forward.3} parent=5 // pred_check_branch
      %110 = sbr.rel (%p107) target = $region12
    $region11: #{down_sequence_forward.3} parent=5 // pred_region
      %s111 = ssub.s32 %s8, 1
      // Predicated region
      $region13: #{down_sequence_forward.3} parent=11 // pred_check
        %p112 = pneg %p69
      $region14: #{down_sequence_forward.3} parent=11 // pred_check_branch
        %114 = sbr.rel (%p112) target = $region16
      $region15: #{down_sequence_forward.3} parent=11 // pred_region
        _
      $region16: #{down_sequence_forward.3} parent=11 // pred_fallthru
        _
    $region12: #{down_sequence_forward.3} parent=5 // pred_fallthru
      _
    %p115 = scmp.lt.s32.totalorder %s8, 2
    // Predicated region
    $region17: #{down_sequence_forward.3} parent=5 // pred_check
      %p116 = pneg %p115
    $region18: #{down_sequence_forward.3} parent=5 // pred_check_branch
      %118 = sbr.rel (%p116) target = $region20
    $region19: #{down_sequence_forward.3} parent=5 // pred_region
      // Predicated region
      $region21: #{down_sequence_forward.3} parent=19 // pred_check
        %p119 = pneg %p42
      $region22: #{down_sequence_forward.3} parent=19 // pred_check_branch
        %121 = sbr.rel (%p119) target = $region24
      $region23: #{down_sequence_forward.3} parent=19 // pred_region
        %p122 = scmp.lt.s32.totalorder %s15, 1
        %s123 = scalar_select %p122, %s15, 1
        %p124 = scmp.lt.s32.totalorder %s16, 0
        %s125 = scalar_select %p124, %s16, 0
        %s126 = smul.addr %s125, 18
        %s127 = smul.addr %s123, 18
        %s128 = sadd.s32 %s126, %s127
        %s129 = smul.addr %s128, 4
        %s130 = scalar_lea.vmem %s0, %s129
      $region24: #{down_sequence_forward.3} parent=19 // pred_fallthru
        _
    $region20: #{down_sequence_forward.3} parent=5 // pred_fallthru
      _
    %p131 = scmp.le.s32.totalorder 1, %s8
    %p132 = scmp.lt.s32.totalorder %s8, 3
    %p133 = pnand %p131, %p132
    %p134 = pneg %p133
    // Predicated region
    $region25: #{down_sequence_forward.3} parent=5 // pred_check
      _
    $region26: #{down_sequence_forward.3} parent=5 // pred_check_branch
      %136 = sbr.rel (%p133) target = $region28
    $region27: #{down_sequence_forward.3} parent=5 // pred_region
      %s137 = ssub.s32 %s8, 1
      %p138 = scmp.lt.s32.totalorder %s17, 1
      %s139 = scalar_select %p138, %s17, 1
      %p140 = scmp.lt.s32.totalorder %s18, 0
      %s141 = scalar_select %p140, %s18, 0
      %s142 = smul.addr %s141, 18
      %s143 = smul.addr %s139, 18
      %s144 = sadd.s32 %s142, %s143
      %s145 = smul.addr %s144, 4
      %s146 = scalar_lea.vmem %s0, %s145
      %p147 = pneg %p48
      %p148 = pneg %p45
      %p149 = pneg %p69
      %p150 = pneg %p66
      %p151 = pneg %p97
      %p152 = pneg %p94
      %s153 = smul.u32 8, %s18
      %p154 = scmp.lt.s32.totalorder %s17, 1
      %s155 = scalar_select %p154, %s17, 1
      %p156 = scmp.lt.s32.totalorder %s153, 7
      %s157 = scalar_select %p156, %s153, 7
      %s158 = smul.addr %s155, 8
      %s159 = sadd.s32 %s157, %s158
      %s160 = smul.addr %s159, 8
      %s161 = scalar_lea.vmem %s2, %s160
      %p162 = scmp.lt.s32.totalorder %s17, 1
      %s163 = scalar_select %p162, %s17, 1
      %p164 = scmp.lt.s32.totalorder %s18, 0
      %s165 = scalar_select %p164, %s18, 0
      %s166 = smul.addr %s165, 18
      %s167 = smul.addr %s163, 18
      %s168 = sadd.s32 %s166, %s167
      %s169 = smul.addr %s168, 4
      %s170 = scalar_lea.vmem %s0, %s169
      %s171 = smul.u32 8, %s18
      %p172 = scmp.lt.s32.totalorder %s17, 1
      %s173 = scalar_select %p172, %s17, 1
      %p174 = scmp.lt.s32.totalorder %s171, 7
      %s175 = scalar_select %p174, %s171, 7
      %s176 = smul.addr %s173, 8
      %s177 = sadd.s32 %s175, %s176
      %s178 = smul.addr %s177, 8
      %s179 = scalar_lea.vmem %s2, %s178
      %s180 = smul.u32 8, %s18
      %v182 = vld [vmem:[%s170] sm:$0xf]
      %v183 = vld [vmem:[%s170 + $0x8] sm:$0xf]
      %v184 = vld [vmem:[%s170 + $0x10] sm:$0xf]
      %v185 = vld [vmem:[%s170 + $0x18] sm:$0xf]
      %v186 = vld [vmem:[%s170 + $0x20] sm:$0xf]
      %v187 = vld [vmem:[%s170 + $0x28] sm:$0xf]
      %v188 = vld [vmem:[%s170 + $0x30] sm:$0xf]
      %v189 = vld [vmem:[%s170 + $0x38] sm:$0xf]
      %v190 = vld [vmem:[%s1] sm:$0xf]
      %v191 = vld [vmem:[%s1 + $0x4] sm:$0xf]
      %v192 = vld [vmem:[%s170 + $0x4] sm:$0x1]
      %v193 = vld [vmem:[%s170 + $0xc] sm:$0x1]
      %v194 = vld [vmem:[%s170 + $0x14] sm:$0x1]
      %v195 = vld [vmem:[%s170 + $0x1c] sm:$0x1]
      %v196 = vld [vmem:[%s170 + $0x24] sm:$0x1]
      %v197 = vld [vmem:[%s170 + $0x2c] sm:$0x1]
      %v198 = vld [vmem:[%s170 + $0x34] sm:$0x1]
      %v199 = vld [vmem:[%s170 + $0x3c] sm:$0x1]
      %vm200 = vsmask.f32 3328
      %vm201 = vsmask.f32 7440
      %vm202 = vmor %vm200, %vm201
      %v204 = vshrl.u32 %v182, 16
      %v206 = vrot.slane %v204, 4
      %v207 = vshll.u32 %v182, 16
      %v209 = vrot.slane %v207, 5
      %v210 = vor.u32 %v206, %v209
      %v211 = vrot.slane %v210, 4
      %v213 = vshll.u32 %v192, 16
      %v215 = vrot.slane %v213, 5
      %v216 = vsel %vm202, %v211, %v215
      %v218 = vshrl.u32 %v183, 16
      %v220 = vrot.slane %v218, 4
      %v221 = vshll.u32 %v183, 16
      %v223 = vrot.slane %v221, 5
      %v224 = vor.u32 %v220, %v223
      %v225 = vrot.slane %v224, 4
      %v227 = vshll.u32 %v193, 16
      %v229 = vrot.slane %v227, 5
      %v230 = vsel %vm202, %v225, %v229
      %v232 = vshrl.u32 %v184, 16
      %v234 = vrot.slane %v232, 4
      %v235 = vshll.u32 %v184, 16
      %v237 = vrot.slane %v235, 5
      %v238 = vor.u32 %v234, %v237
      %v239 = vrot.slane %v238, 4
      %v241 = vshll.u32 %v194, 16
      %v243 = vrot.slane %v241, 5
      %v244 = vsel %vm202, %v239, %v243
      %v246 = vshrl.u32 %v185, 16
      %v248 = vrot.slane %v246, 4
      %v249 = vshll.u32 %v185, 16
      %v251 = vrot.slane %v249, 5
      %v252 = vor.u32 %v248, %v251
      %v253 = vrot.slane %v252, 4
      %v255 = vshll.u32 %v195, 16
      %v257 = vrot.slane %v255, 5
      %v258 = vsel %vm202, %v253, %v257
      %v260 = vshrl.u32 %v186, 16
      %v262 = vrot.slane %v260, 4
      %v263 = vshll.u32 %v186, 16
      %v265 = vrot.slane %v263, 5
      %v266 = vor.u32 %v262, %v265
      %v267 = vrot.slane %v266, 4
      %v269 = vshll.u32 %v196, 16
      %v271 = vrot.slane %v269, 5
      %v272 = vsel %vm202, %v267, %v271
      %v274 = vshrl.u32 %v187, 16
      %v276 = vrot.slane %v274, 4
      %v277 = vshll.u32 %v187, 16
      %v279 = vrot.slane %v277, 5
      %v280 = vor.u32 %v276, %v279
      %v281 = vrot.slane %v280, 4
      %v283 = vshll.u32 %v197, 16
      %v285 = vrot.slane %v283, 5
      %v286 = vsel %vm202, %v281, %v285
      %v288 = vshrl.u32 %v188, 16
      %v290 = vrot.slane %v288, 4
      %v291 = vshll.u32 %v188, 16
      %v293 = vrot.slane %v291, 5
      %v294 = vor.u32 %v290, %v293
      %v295 = vrot.slane %v294, 4
      %v297 = vshll.u32 %v198, 16
      %v299 = vrot.slane %v297, 5
      %v300 = vsel %vm202, %v295, %v299
      %v302 = vshrl.u32 %v189, 16
      %v304 = vrot.slane %v302, 4
      %v305 = vshll.u32 %v189, 16
      %v307 = vrot.slane %v305, 5
      %v308 = vor.u32 %v304, %v307
      %v309 = vrot.slane %v308, 4
      %v311 = vshll.u32 %v199, 16
      %v313 = vrot.slane %v311, 5
      %v314 = vsel %vm202, %v309, %v313
      %s315 = scalar_lea.vmem %s1, 8
      %v316 = vld [vmem:[%s315] sm:$0xf]
      %v317 = vld [vmem:[%s315 + $0x4] sm:$0xf]
      %v318 = vunpack.c.l.b16 %v216
      %v319 = vunpack.c.l.b16 %v230
      %v320 = vunpack.c.l.b16 %v244
      %v321 = vunpack.c.l.b16 %v258
      %v322 = vunpack.c.l.b16 %v272
      %v323 = vunpack.c.l.b16 %v286
      %v324 = vunpack.c.l.b16 %v300
      %v325 = vunpack.c.l.b16 %v314
      %v326 = vpack.c.b16 %v319, %v318
      %v327 = vpack.c.b16 %v321, %v320
      %v328 = vpack.c.b16 %v323, %v322
      %v329 = vpack.c.b16 %v325, %v324
      %v332 = vunpack.c.l.b16 %v316
      %v333 = vunpack.c.l.b16 %v317
      %v334 = vpack.c.b16 %v333, %v332
      %vm336 = vcmask 130048
      %v338 = vsel %vm336, %v326, 0
      %v341 = vsel %vm336, %v327, 0
      %v344 = vsel %vm336, %v328, 0
      %v347 = vsel %vm336, %v329, 0
      %349 = vmatprep.subr.bf16.mxu0 0
      %350 = vmatpush1.bf16.msra.mxu0 0
      %351 = vmatprep.subr.bf16.mxu0 0
      %352 = vmatpush1.bf16.msra.mxu0 0
      %353 = vmatprep.subr.bf16.mxu0 0
      %354 = vmatpush1.bf16.msra.mxu0 0
      %355 = vmatprep.subr.bf16.mxu0 0
      %356 = vmatpush1.bf16.msra.mxu0 0
      %357 = vmatprep.subr.bf16.mxu0 0
      %358 = vmatpush1.bf16.msra.mxu0 0
      %359 = vmatprep.subr.bf16.mxu0 0
      %360 = vmatpush1.bf16.msra.mxu0 0
      %361 = vmatprep.subr.bf16.mxu0 0
      %362 = vmatpush1.bf16.msra.mxu0 0
      %363 = vmatprep.subr.bf16.mxu0 0
      %364 = vmatpush1.bf16.msra.mxu0 %v334
      %365 = vmatprep.subr.bf16.mxu0 0
      %366 = vmatpush2.bf16.msra.mxu0 0
      %367 = vmatprep.subr.bf16.mxu0 0
      %368 = vmatpush2.bf16.msra.mxu0 0
      %369 = vmatprep.subr.bf16.mxu0 0
      %370 = vmatpush2.bf16.msra.mxu0 0
      %371 = vmatprep.subr.bf16.mxu0 0
      %372 = vmatpush2.bf16.msra.mxu0 0
      %373 = vmatprep.subr.bf16.mxu0 0
      %374 = vmatpush2.bf16.msra.mxu0 0
      %375 = vmatprep.subr.bf16.mxu0 0
      %376 = vmatpush2.bf16.msra.mxu0 0
      %377 = vmatprep.subr.bf16.mxu0 0
      %378 = vmatpush2.bf16.msra.mxu0 0
      %379 = vmatprep.subr.bf16.mxu0 0
      %380 = vmatpush2.bf16.msra.mxu0 0
      %381 = vmatprep.mubr.bf16.mxu0 0
      %382 = vmatmul.mubr.bf16.gmra.mxu0 %v338
      %v383 = vpop.f32.mrf.mxu0
      %v384 = vadd.f32 0.0, %v383
      %v385 = vpop.f32.mrf.mxu0
      %v386 = vpop.f32.mrf.mxu0
      %v387 = vadd.f32 0.0, %v386
      %v388 = vpop.f32.mrf.mxu0
      %389 = vmatprep.mubr.bf16.mxu0 0
      %390 = vmatmul.mubr.bf16.gmra.mxu0 %v341
      %v391 = vpop.f32.mrf.mxu0
      %v392 = vadd.f32 0.0, %v391
      %v393 = vpop.f32.mrf.mxu0
      %v394 = vpop.f32.mrf.mxu0
      %v395 = vadd.f32 0.0, %v394
      %v396 = vpop.f32.mrf.mxu0
      %397 = vmatprep.mubr.bf16.mxu0 0
      %398 = vmatmul.mubr.bf16.gmra.mxu0 %v344
      %v399 = vpop.f32.mrf.mxu0
      %v400 = vadd.f32 0.0, %v399
      %v401 = vpop.f32.mrf.mxu0
      %v402 = vpop.f32.mrf.mxu0
      %v403 = vadd.f32 0.0, %v402
      %v404 = vpop.f32.mrf.mxu0
      %405 = vmatprep.mubr.bf16.mxu0 0
      %406 = vmatmul.mubr.bf16.gmra.mxu0 %v347
      %v407 = vpop.f32.mrf.mxu0
      %v408 = vadd.f32 0.0, %v407
      %v409 = vpop.f32.mrf.mxu0
      %v410 = vpop.f32.mrf.mxu0
      %v411 = vadd.f32 0.0, %v410
      %v412 = vpop.f32.mrf.mxu0
      %413 = vdwg.mxu0
      %v422 = vunpack.c.l.b16 %v182
      %v423 = vunpack.c.l.b16 %v183
      %v424 = vunpack.c.l.b16 %v184
      %v425 = vunpack.c.l.b16 %v185
      %v426 = vunpack.c.l.b16 %v186
      %v427 = vunpack.c.l.b16 %v187
      %v428 = vunpack.c.l.b16 %v188
      %v429 = vunpack.c.l.b16 %v189
      %v430 = vpack.c.b16 %v423, %v422
      %v431 = vpack.c.b16 %v425, %v424
      %v432 = vpack.c.b16 %v427, %v426
      %v433 = vpack.c.b16 %v429, %v428
      %v436 = vunpack.c.l.b16 %v190
      %v437 = vunpack.c.l.b16 %v191
      %v438 = vpack.c.b16 %v437, %v436
      %v441 = vsel %vm336, %v430, 0
      %v444 = vsel %vm336, %v431, 0
      %v447 = vsel %vm336, %v432, 0
      %v450 = vsel %vm336, %v433, 0
      %452 = vmatprep.subr.bf16.mxu0 0
      %453 = vmatpush1.bf16.msra.mxu0 0
      %454 = vmatprep.subr.bf16.mxu0 0
      %455 = vmatpush1.bf16.msra.mxu0 0
      %456 = vmatprep.subr.bf16.mxu0 0
      %457 = vmatpush1.bf16.msra.mxu0 0
      %458 = vmatprep.subr.bf16.mxu0 0
      %459 = vmatpush1.bf16.msra.mxu0 0
      %460 = vmatprep.subr.bf16.mxu0 0
      %461 = vmatpush1.bf16.msra.mxu0 0
      %462 = vmatprep.subr.bf16.mxu0 0
      %463 = vmatpush1.bf16.msra.mxu0 0
      %464 = vmatprep.subr.bf16.mxu0 0
      %465 = vmatpush1.bf16.msra.mxu0 0
      %466 = vmatprep.subr.bf16.mxu0 0
      %467 = vmatpush1.bf16.msra.mxu0 %v438
      %468 = vmatprep.subr.bf16.mxu0 0
      %469 = vmatpush2.bf16.msra.mxu0 0
      %470 = vmatprep.subr.bf16.mxu0 0
      %471 = vmatpush2.bf16.msra.mxu0 0
      %472 = vmatprep.subr.bf16.mxu0 0
      %473 = vmatpush2.bf16.msra.mxu0 0
      %474 = vmatprep.subr.bf16.mxu0 0
      %475 = vmatpush2.bf16.msra.mxu0 0
      %476 = vmatprep.subr.bf16.mxu0 0
      %477 = vmatpush2.bf16.msra.mxu0 0
      %478 = vmatprep.subr.bf16.mxu0 0
      %479 = vmatpush2.bf16.msra.mxu0 0
      %480 = vmatprep.subr.bf16.mxu0 0
      %481 = vmatpush2.bf16.msra.mxu0 0
      %482 = vmatprep.subr.bf16.mxu0 0
      %483 = vmatpush2.bf16.msra.mxu0 0
      %484 = vmatprep.mubr.bf16.mxu0 0
      %485 = vmatmul.mubr.bf16.gmra.mxu0 %v441
      %v486 = vpop.f32.mrf.mxu0
      %v487 = vadd.f32 %v384, %v486
      %v488 = vpop.f32.mrf.mxu0
      %v489 = vpop.f32.mrf.mxu0
      %v490 = vadd.f32 %v387, %v489
      %v491 = vpop.f32.mrf.mxu0
      %492 = vmatprep.mubr.bf16.mxu0 0
      %493 = vmatmul.mubr.bf16.gmra.mxu0 %v444
      %v494 = vpop.f32.mrf.mxu0
      %v495 = vadd.f32 %v392, %v494
      %v496 = vpop.f32.mrf.mxu0
      %v497 = vpop.f32.mrf.mxu0
      %v498 = vadd.f32 %v395, %v497
      %v499 = vpop.f32.mrf.mxu0
      %500 = vmatprep.mubr.bf16.mxu0 0
      %501 = vmatmul.mubr.bf16.gmra.mxu0 %v447
      %v502 = vpop.f32.mrf.mxu0
      %v503 = vadd.f32 %v400, %v502
      %v504 = vpop.f32.mrf.mxu0
      %v505 = vpop.f32.mrf.mxu0
      %v506 = vadd.f32 %v403, %v505
      %v507 = vpop.f32.mrf.mxu0
      %508 = vmatprep.mubr.bf16.mxu0 0
      %509 = vmatmul.mubr.bf16.gmra.mxu0 %v450
      %v510 = vpop.f32.mrf.mxu0
      %v511 = vadd.f32 %v408, %v510
      %v512 = vpop.f32.mrf.mxu0
      %v513 = vpop.f32.mrf.mxu0
      %v514 = vadd.f32 %v411, %v513
      %v515 = vpop.f32.mrf.mxu0
      %516 = vdwg.mxu0
      %s517 = scalar_lea.vmem %s170, 8
      %v518 = vld [vmem:[%s517] sm:$0xf]
      %v519 = vld [vmem:[%s517 + $0x8] sm:$0xf]
      %v520 = vld [vmem:[%s517 + $0x10] sm:$0xf]
      %v521 = vld [vmem:[%s517 + $0x18] sm:$0xf]
      %v522 = vld [vmem:[%s517 + $0x20] sm:$0xf]
      %v523 = vld [vmem:[%s517 + $0x28] sm:$0xf]
      %v524 = vld [vmem:[%s517 + $0x30] sm:$0xf]
      %v525 = vld [vmem:[%s517 + $0x38] sm:$0xf]
      %s526 = scalar_lea.vmem %s1, 16
      %v527 = vld [vmem:[%s526] sm:$0xf]
      %v528 = vld [vmem:[%s526 + $0x4] sm:$0xf]
      %v537 = vunpack.c.l.b16 %v518
      %v538 = vunpack.c.l.b16 %v519
      %v539 = vunpack.c.l.b16 %v520
      %v540 = vunpack.c.l.b16 %v521
      %v541 = vunpack.c.l.b16 %v522
      %v542 = vunpack.c.l.b16 %v523
      %v543 = vunpack.c.l.b16 %v524
      %v544 = vunpack.c.l.b16 %v525
      %v545 = vpack.c.b16 %v538, %v537
      %v546 = vpack.c.b16 %v540, %v539
      %v547 = vpack.c.b16 %v542, %v541
      %v548 = vpack.c.b16 %v544, %v543
      %v551 = vunpack.c.l.b16 %v527
      %v552 = vunpack.c.l.b16 %v528
      %v553 = vpack.c.b16 %v552, %v551
      %v556 = vsel %vm336, %v545, 0
      %v559 = vsel %vm336, %v546, 0
      %v562 = vsel %vm336, %v547, 0
      %v565 = vsel %vm336, %v548, 0
      %567 = vmatprep.subr.bf16.mxu0 0
      %568 = vmatpush1.bf16.msra.mxu0 0
      %569 = vmatprep.subr.bf16.mxu0 0
      %570 = vmatpush1.bf16.msra.mxu0 0
      %571 = vmatprep.subr.bf16.mxu0 0
      %572 = vmatpush1.bf16.msra.mxu0 0
      %573 = vmatprep.subr.bf16.mxu0 0
      %574 = vmatpush1.bf16.msra.mxu0 0
      %575 = vmatprep.subr.bf16.mxu0 0
      %576 = vmatpush1.bf16.msra.mxu0 0
      %577 = vmatprep.subr.bf16.mxu0 0
      %578 = vmatpush1.bf16.msra.mxu0 0
      %579 = vmatprep.subr.bf16.mxu0 0
      %580 = vmatpush1.bf16.msra.mxu0 0
      %581 = vmatprep.subr.bf16.mxu0 0
      %582 = vmatpush1.bf16.msra.mxu0 %v553
      %583 = vmatprep.subr.bf16.mxu0 0
      %584 = vmatpush2.bf16.msra.mxu0 0
      %585 = vmatprep.subr.bf16.mxu0 0
      %586 = vmatpush2.bf16.msra.mxu0 0
      %587 = vmatprep.subr.bf16.mxu0 0
      %588 = vmatpush2.bf16.msra.mxu0 0
      %589 = vmatprep.subr.bf16.mxu0 0
      %590 = vmatpush2.bf16.msra.mxu0 0
      %591 = vmatprep.subr.bf16.mxu0 0
      %592 = vmatpush2.bf16.msra.mxu0 0
      %593 = vmatprep.subr.bf16.mxu0 0
      %594 = vmatpush2.bf16.msra.mxu0 0
      %595 = vmatprep.subr.bf16.mxu0 0
      %596 = vmatpush2.bf16.msra.mxu0 0
      %597 = vmatprep.subr.bf16.mxu0 0
      %598 = vmatpush2.bf16.msra.mxu0 0
      %599 = vmatprep.mubr.bf16.mxu0 0
      %600 = vmatmul.mubr.bf16.gmra.mxu0 %v556
      %v601 = vpop.f32.mrf.mxu0
      %v602 = vadd.f32 0.0, %v601
      %v603 = vpop.f32.mrf.mxu0
      %v604 = vpop.f32.mrf.mxu0
      %v605 = vadd.f32 0.0, %v604
      %v606 = vpop.f32.mrf.mxu0
      %607 = vmatprep.mubr.bf16.mxu0 0
      %608 = vmatmul.mubr.bf16.gmra.mxu0 %v559
      %v609 = vpop.f32.mrf.mxu0
      %v610 = vadd.f32 0.0, %v609
      %v611 = vpop.f32.mrf.mxu0
      %v612 = vpop.f32.mrf.mxu0
      %v613 = vadd.f32 0.0, %v612
      %v614 = vpop.f32.mrf.mxu0
      %615 = vmatprep.mubr.bf16.mxu0 0
      %616 = vmatmul.mubr.bf16.gmra.mxu0 %v562
      %v617 = vpop.f32.mrf.mxu0
      %v618 = vadd.f32 0.0, %v617
      %v619 = vpop.f32.mrf.mxu0
      %v620 = vpop.f32.mrf.mxu0
      %v621 = vadd.f32 0.0, %v620
      %v622 = vpop.f32.mrf.mxu0
      %623 = vmatprep.mubr.bf16.mxu0 0
      %624 = vmatmul.mubr.bf16.gmra.mxu0 %v565
      %v625 = vpop.f32.mrf.mxu0
      %v626 = vadd.f32 0.0, %v625
      %v627 = vpop.f32.mrf.mxu0
      %v628 = vpop.f32.mrf.mxu0
      %v629 = vadd.f32 0.0, %v628
      %v630 = vpop.f32.mrf.mxu0
      %631 = vdwg.mxu0
      %v632 = vadd.f32 %v487, %v602
      %v633 = vadd.f32 %v490, %v605
      %v634 = vadd.f32 %v495, %v610
      %v635 = vadd.f32 %v498, %v613
      %v636 = vadd.f32 %v503, %v618
      %v637 = vadd.f32 %v506, %v621
      %v638 = vadd.f32 %v511, %v626
      %v639 = vadd.f32 %v514, %v629
      %v640 = vld [vmem:[%s517] sm:$0xf]
      %v641 = vld [vmem:[%s517 + $0x4] sm:$0x1]
      %v642 = vld [vmem:[%s517 + $0x8] sm:$0xf]
      %v643 = vld [vmem:[%s517 + $0xc] sm:$0x1]
      %v644 = vld [vmem:[%s517 + $0x10] sm:$0xf]
      %v645 = vld [vmem:[%s517 + $0x14] sm:$0x1]
      %v646 = vld [vmem:[%s517 + $0x18] sm:$0xf]
      %v647 = vld [vmem:[%s517 + $0x1c] sm:$0x1]
      %v648 = vld [vmem:[%s517 + $0x20] sm:$0xf]
      %v649 = vld [vmem:[%s517 + $0x24] sm:$0x1]
      %v650 = vld [vmem:[%s517 + $0x28] sm:$0xf]
      %v651 = vld [vmem:[%s517 + $0x2c] sm:$0x1]
      %v652 = vld [vmem:[%s517 + $0x30] sm:$0xf]
      %v653 = vld [vmem:[%s517 + $0x34] sm:$0x1]
      %v654 = vld [vmem:[%s517 + $0x38] sm:$0xf]
      %v655 = vld [vmem:[%s517 + $0x3c] sm:$0x1]
      %v657 = vshrl.u32 %v640, 16
      %v659 = vrot.slane %v657, 4
      %v660 = vshll.u32 %v640, 16
      %v662 = vrot.slane %v660, 5
      %v663 = vor.u32 %v659, %v662
      %v664 = vrot.slane %v663, 4
      %v666 = vshll.u32 %v641, 16
      %v668 = vrot.slane %v666, 5
      %v669 = vsel %vm202, %v664, %v668
      %v671 = vshrl.u32 %v642, 16
      %v673 = vrot.slane %v671, 4
      %v674 = vshll.u32 %v642, 16
      %v676 = vrot.slane %v674, 5
      %v677 = vor.u32 %v673, %v676
      %v678 = vrot.slane %v677, 4
      %v680 = vshll.u32 %v643, 16
      %v682 = vrot.slane %v680, 5
      %v683 = vsel %vm202, %v678, %v682
      %v685 = vshrl.u32 %v644, 16
      %v687 = vrot.slane %v685, 4
      %v688 = vshll.u32 %v644, 16
      %v690 = vrot.slane %v688, 5
      %v691 = vor.u32 %v687, %v690
      %v692 = vrot.slane %v691, 4
      %v694 = vshll.u32 %v645, 16
      %v696 = vrot.slane %v694, 5
      %v697 = vsel %vm202, %v692, %v696
      %v699 = vshrl.u32 %v646, 16
      %v701 = vrot.slane %v699, 4
      %v702 = vshll.u32 %v646, 16
      %v704 = vrot.slane %v702, 5
      %v705 = vor.u32 %v701, %v704
      %v706 = vrot.slane %v705, 4
      %v708 = vshll.u32 %v647, 16
      %v710 = vrot.slane %v708, 5
      %v711 = vsel %vm202, %v706, %v710
      %v713 = vshrl.u32 %v648, 16
      %v715 = vrot.slane %v713, 4
      %v716 = vshll.u32 %v648, 16
      %v718 = vrot.slane %v716, 5
      %v719 = vor.u32 %v715, %v718
      %v720 = vrot.slane %v719, 4
      %v722 = vshll.u32 %v649, 16
      %v724 = vrot.slane %v722, 5
      %v725 = vsel %vm202, %v720, %v724
      %v727 = vshrl.u32 %v650, 16
      %v729 = vrot.slane %v727, 4
      %v730 = vshll.u32 %v650, 16
      %v732 = vrot.slane %v730, 5
      %v733 = vor.u32 %v729, %v732
      %v734 = vrot.slane %v733, 4
      %v736 = vshll.u32 %v651, 16
      %v738 = vrot.slane %v736, 5
      %v739 = vsel %vm202, %v734, %v738
      %v741 = vshrl.u32 %v652, 16
      %v743 = vrot.slane %v741, 4
      %v744 = vshll.u32 %v652, 16
      %v746 = vrot.slane %v744, 5
      %v747 = vor.u32 %v743, %v746
      %v748 = vrot.slane %v747, 4
      %v750 = vshll.u32 %v653, 16
      %v752 = vrot.slane %v750, 5
      %v753 = vsel %vm202, %v748, %v752
      %v755 = vshrl.u32 %v654, 16
      %v757 = vrot.slane %v755, 4
      %v758 = vshll.u32 %v654, 16
      %v760 = vrot.slane %v758, 5
      %v761 = vor.u32 %v757, %v760
      %v762 = vrot.slane %v761, 4
      %v764 = vshll.u32 %v655, 16
      %v766 = vrot.slane %v764, 5
      %v767 = vsel %vm202, %v762, %v766
      %s768 = scalar_lea.vmem %s1, 24
      %v769 = vld [vmem:[%s768] sm:$0xf]
      %v770 = vld [vmem:[%s768 + $0x4] sm:$0xf]
      %v771 = vunpack.c.l.b16 %v669
      %v772 = vunpack.c.l.b16 %v683
      %v773 = vunpack.c.l.b16 %v697
      %v774 = vunpack.c.l.b16 %v711
      %v775 = vunpack.c.l.b16 %v725
      %v776 = vunpack.c.l.b16 %v739
      %v777 = vunpack.c.l.b16 %v753
      %v778 = vunpack.c.l.b16 %v767
      %v779 = vpack.c.b16 %v772, %v771
      %v780 = vpack.c.b16 %v774, %v773
      %v781 = vpack.c.b16 %v776, %v775
      %v782 = vpack.c.b16 %v778, %v777
      %v785 = vunpack.c.l.b16 %v769
      %v786 = vunpack.c.l.b16 %v770
      %v787 = vpack.c.b16 %v786, %v785
      %v790 = vsel %vm336, %v779, 0
      %v793 = vsel %vm336, %v780, 0
      %v796 = vsel %vm336, %v781, 0
      %v799 = vsel %vm336, %v782, 0
      %801 = vmatprep.subr.bf16.mxu0 0
      %802 = vmatpush1.bf16.msra.mxu0 0
      %803 = vmatprep.subr.bf16.mxu0 0
      %804 = vmatpush1.bf16.msra.mxu0 0
      %805 = vmatprep.subr.bf16.mxu0 0
      %806 = vmatpush1.bf16.msra.mxu0 0
      %807 = vmatprep.subr.bf16.mxu0 0
      %808 = vmatpush1.bf16.msra.mxu0 0
      %809 = vmatprep.subr.bf16.mxu0 0
      %810 = vmatpush1.bf16.msra.mxu0 0
      %811 = vmatprep.subr.bf16.mxu0 0
      %812 = vmatpush1.bf16.msra.mxu0 0
      %813 = vmatprep.subr.bf16.mxu0 0
      %814 = vmatpush1.bf16.msra.mxu0 0
      %815 = vmatprep.subr.bf16.mxu0 0
      %816 = vmatpush1.bf16.msra.mxu0 %v787
      %817 = vmatprep.subr.bf16.mxu0 0
      %818 = vmatpush2.bf16.msra.mxu0 0
      %819 = vmatprep.subr.bf16.mxu0 0
      %820 = vmatpush2.bf16.msra.mxu0 0
      %821 = vmatprep.subr.bf16.mxu0 0
      %822 = vmatpush2.bf16.msra.mxu0 0
      %823 = vmatprep.subr.bf16.mxu0 0
      %824 = vmatpush2.bf16.msra.mxu0 0
      %825 = vmatprep.subr.bf16.mxu0 0
      %826 = vmatpush2.bf16.msra.mxu0 0
      %827 = vmatprep.subr.bf16.mxu0 0
      %828 = vmatpush2.bf16.msra.mxu0 0
      %829 = vmatprep.subr.bf16.mxu0 0
      %830 = vmatpush2.bf16.msra.mxu0 0
      %831 = vmatprep.subr.bf16.mxu0 0
      %832 = vmatpush2.bf16.msra.mxu0 0
      %833 = vmatprep.mubr.bf16.mxu0 0
      %834 = vmatmul.mubr.bf16.gmra.mxu0 %v790
      %v835 = vpop.f32.mrf.mxu0
      %v836 = vadd.f32 0.0, %v835
      %v837 = vpop.f32.mrf.mxu0
      %v838 = vpop.f32.mrf.mxu0
      %v839 = vadd.f32 0.0, %v838
      %v840 = vpop.f32.mrf.mxu0
      %841 = vmatprep.mubr.bf16.mxu0 0
      %842 = vmatmul.mubr.bf16.gmra.mxu0 %v793
      %v843 = vpop.f32.mrf.mxu0
      %v844 = vadd.f32 0.0, %v843
      %v845 = vpop.f32.mrf.mxu0
      %v846 = vpop.f32.mrf.mxu0
      %v847 = vadd.f32 0.0, %v846
      %v848 = vpop.f32.mrf.mxu0
      %849 = vmatprep.mubr.bf16.mxu0 0
      %850 = vmatmul.mubr.bf16.gmra.mxu0 %v796
      %v851 = vpop.f32.mrf.mxu0
      %v852 = vadd.f32 0.0, %v851
      %v853 = vpop.f32.mrf.mxu0
      %v854 = vpop.f32.mrf.mxu0
      %v855 = vadd.f32 0.0, %v854
      %v856 = vpop.f32.mrf.mxu0
      %857 = vmatprep.mubr.bf16.mxu0 0
      %858 = vmatmul.mubr.bf16.gmra.mxu0 %v799
      %v859 = vpop.f32.mrf.mxu0
      %v860 = vadd.f32 0.0, %v859
      %v861 = vpop.f32.mrf.mxu0
      %v862 = vpop.f32.mrf.mxu0
      %v863 = vadd.f32 0.0, %v862
      %v864 = vpop.f32.mrf.mxu0
      %865 = vdwg.mxu0
      %v866 = vadd.f32 %v632, %v836
      %v867 = vadd.f32 %v633, %v839
      %v868 = vadd.f32 %v634, %v844
      %v869 = vadd.f32 %v635, %v847
      %v870 = vadd.f32 %v636, %v852
      %v871 = vadd.f32 %v637, %v855
      %v872 = vadd.f32 %v638, %v860
      %v873 = vadd.f32 %v639, %v863
      %vm874 = vcmp.gt.f32.partialorder %v866, 0.0
      %vm875 = vcmp.gt.f32.partialorder %v867, 0.0
      %vm876 = vcmp.gt.f32.partialorder %v868, 0.0
      %vm877 = vcmp.gt.f32.partialorder %v869, 0.0
      %vm878 = vcmp.gt.f32.partialorder %v870, 0.0
      %vm879 = vcmp.gt.f32.partialorder %v871, 0.0
      %vm880 = vcmp.gt.f32.partialorder %v872, 0.0
      %vm881 = vcmp.gt.f32.partialorder %v873, 0.0
      %v882 = vmul.f32 %v866, 0.01
      %v883 = vmul.f32 %v867, 0.01
      %v884 = vmul.f32 %v868, 0.01
      %v885 = vmul.f32 %v869, 0.01
      %v886 = vmul.f32 %v870, 0.01
      %v887 = vmul.f32 %v871, 0.01
      %v888 = vmul.f32 %v872, 0.01
      %v889 = vmul.f32 %v873, 0.01
      %v890 = vsel %vm874, %v866, %v882
      %v891 = vsel %vm875, %v867, %v883
      %v892 = vsel %vm876, %v868, %v884
      %v893 = vsel %vm877, %v869, %v885
      %v894 = vsel %vm878, %v870, %v886
      %v895 = vsel %vm879, %v871, %v887
      %v896 = vsel %vm880, %v872, %v888
      %v897 = vsel %vm881, %v873, %v889
      %vm898 = vcmask 64512
      %899 = vst.msk [vmem:[%s179] sm:$0xff] %vm898, %v890
      %900 = vst.msk [vmem:[%s179 + $0x8] sm:$0xff] %vm898, %v891
      %901 = vst.msk [vmem:[%s179 + $0x10] sm:$0xff] %vm898, %v892
      %902 = vst.msk [vmem:[%s179 + $0x18] sm:$0xff] %vm898, %v893
      %903 = vst.msk [vmem:[%s179 + $0x20] sm:$0xff] %vm898, %v894
      %904 = vst.msk [vmem:[%s179 + $0x28] sm:$0xff] %vm898, %v895
      %905 = vst.msk [vmem:[%s179 + $0x30] sm:$0xff] %vm898, %v896
      %906 = vst.msk [vmem:[%s179 + $0x38] sm:$0xff] %vm898, %v897
      %s907 = smul.u32 8, %s18
      %p908 = scmp.lt.s32.totalorder %s17, 1
      %s909 = scalar_select %p908, %s17, 1
      %p910 = scmp.lt.s32.totalorder %s907, 7
      %s911 = scalar_select %p910, %s907, 7
      %s912 = smul.addr %s909, 8
      %s913 = sadd.s32 %s911, %s912
      %s914 = smul.addr %s913, 8
      %s915 = scalar_lea.vmem %s2, %s914
      // Predicated region
      $region29: #{down_sequence_forward.3} parent=27 // pred_check
        %p916 = pneg %p94
      $region30: #{down_sequence_forward.3} parent=27 // pred_check_branch
        %918 = sbr.rel (%p916) target = $region32
      $region31: #{down_sequence_forward.3} parent=27 // pred_region
        %s919 = smul.u32 8, %s18
      $region32: #{down_sequence_forward.3} parent=27 // pred_fallthru
        _
    $region28: #{down_sequence_forward.3} parent=5 // pred_fallthru
      _
    %p920 = scmp.le.s32.totalorder 2, %s8
    // Predicated region
    $region33: #{down_sequence_forward.3} parent=5 // pred_check
      %p921 = pneg %p920
    $region34: #{down_sequence_forward.3} parent=5 // pred_check_branch
      %923 = sbr.rel (%p921) target = $region36
    $region35: #{down_sequence_forward.3} parent=5 // pred_region
      %s924 = ssub.s32 %s8, 2
      // Predicated region
      $region37: #{down_sequence_forward.3} parent=35 // pred_check
        %p925 = pneg %p100
      $region38: #{down_sequence_forward.3} parent=35 // pred_check_branch
        %927 = sbr.rel (%p925) target = $region40
      $region39: #{down_sequence_forward.3} parent=35 // pred_region
        %s928 = smul.u32 8, %s20
        %p929 = scmp.lt.s32.totalorder %s19, 1
        %s930 = scalar_select %p929, %s19, 1
        %p931 = scmp.lt.s32.totalorder %s928, 7
        %s932 = scalar_select %p931, %s928, 7
        %s933 = smul.addr %s930, 8
        %s934 = sadd.s32 %s932, %s933
        %s935 = smul.addr %s934, 8
        %s936 = scalar_lea.vmem %s2, %s935
      $region40: #{down_sequence_forward.3} parent=35 // pred_fallthru
        _
    $region36: #{down_sequence_forward.3} parent=5 // pred_fallthru
      _
  $region6: #{down_sequence_forward.3} parent=0 // loop_footer
    %s12 = sadd.s32 1, %s8
  $region7: #{down_sequence_forward.3} parent=0 // loop_footer_branch
    %7 = sbr.rel target = $region3
  $region8: #{down_sequence_forward.3} parent=0 // loop_exit
    _

// kernel: down_sequence_forward.4
$region0: #{down_sequence_forward.4}
  #allocation0 [shape = 'u32[]', space=smem, size = 0x4, offset = 0x4, fixed_abs, tag = 'smem constant byte address 0x4 - core index']
  #allocation1 [shape = 'u32[144,128]{1,0:T(1,128)}', space=vmem, size = 0x12000, scoped, tag = 'internal scratch']
  %s0 = inlined_call_operand.vmem [shape: bf16[2,1,5,5,32], index: 0, kind: input, shape index: {}]
  %s1 = inlined_call_operand.vmem [shape: bf16[4,32,16], index: 1, kind: input, shape index: {}]
  %s2 = inlined_call_operand.vmem [shape: f32[2,16,16], index: 2, kind: output, shape index: {}]
  %s3 = sld [smem:[#allocation0]]
  $region41: #{down_sequence_forward.4} parent=0
    _
  %s5 = ssub.s32 1, %s3
  %s6 = scalar_select 0, %s5, %s3
  loop: start=0, step=1, limit=4
  $region2: #{down_sequence_forward.4} parent=0 // loop_pre_header
    _
  $region3: #{down_sequence_forward.4} parent=0 // loop_header
    %s8 = sphi 0, %s12
    %p9 = scmp.ge.s32.totalorder %s8, 4
    %s15 = sphi 0, %s27
    %s16 = sphi 0, %s23
    %s17 = sphi 0, %s15
    %s18 = sphi 0, %s16
    %s19 = sphi 0, %s17
    %s20 = sphi 0, %s18
    %s32 = sphi 0, %s34
    %s35 = sphi 0, %s32
    %s36 = sphi 0, %s35
    %s52 = sphi 0, %s36
    %s56 = sphi 0, %s56
    %s58 = sphi 0, %s56
    %s59 = sphi 0, %s58
    %s73 = sphi 0, %s59
    %s81 = sphi 0, %s83
    %s84 = sphi 0, %s81
    %s85 = sphi 0, %s84
    %s101 = sphi 0, %s85
  $region4: #{down_sequence_forward.4} parent=0 // loop_header_branch
    %11 = sbr.rel (%p9) target = $region8
  $region5: #{down_sequence_forward.4} parent=0 // loop_body
    %s13 = ssub.s32 %s8, 1
    %s14 = ssub.s32 %s8, 2
    %s21 = sadd.s32 1, %s16
    %p22 = scmp.ge.s32.totalorder %s21, 1
    %s23 = scalar_select %p22, 0, %s21
    %s24 = sadd.s32 1, %s15
    %s25 = scalar_select %p22, %s24, %s15
    %p26 = scmp.ge.s32.totalorder %s25, 2
    %s27 = scalar_select %p26, 0, %s25
    %s28 = ssub.s32 %s15, %s27
    %s29 = ssub.s32 %s16, %s23
    %s30 = sor.u32 %s28, %s29
    %p31 = scmp.eq.s32.totalorder %s30, 0
    %s33 = sadd.s32 %s32, 1
    %s34 = scalar_select %p31, %s32, %s33
    %p37 = pneg %p31
    %p38 = scmp.eq.s32.totalorder %s8, 1
    %p39 = por %p37, %p38
    %p40 = scmp.ne.s32.totalorder %s32, %s35
    %p41 = scmp.eq.s32.totalorder %s8, 0
    %p42 = por %p40, %p41
    %p43 = scmp.ne.s32.totalorder %s32, %s35
    %p44 = scmp.eq.s32.totalorder %s13, 1
    %p45 = por %p43, %p44
    %p46 = scmp.ne.s32.totalorder %s35, %s36
    %p47 = scmp.eq.s32.totalorder %s13, 0
    %p48 = por %p46, %p47
    %p49 = scmp.ne.s32.totalorder %s35, %s36
    %p50 = scmp.eq.s32.totalorder %s14, 1
    %p51 = por %p49, %p50
    %p53 = scmp.ne.s32.totalorder %s36, %s52
    %p54 = scmp.eq.s32.totalorder %s14, 0
    %p55 = por %p53, %p54
    %s57 = sadd.s32 %s56, 1
    %p60 = scmp.eq.s32.totalorder %s8, 1
    %p61 = scmp.ne.s32.totalorder %s56, %s58
    %p62 = scmp.eq.s32.totalorder %s8, 0
    %p63 = por %p61, %p62
    %p64 = scmp.ne.s32.totalorder %s56, %s58
    %p65 = scmp.eq.s32.totalorder %s13, 1
    %p66 = por %p64, %p65
    %p67 = scmp.ne.s32.totalorder %s58, %s59
    %p68 = scmp.eq.s32.totalorder %s13, 0
    %p69 = por %p67, %p68
    %p70 = scmp.ne.s32.totalorder %s58, %s59
    %p71 = scmp.eq.s32.totalorder %s14, 1
    %p72 = por %p70, %p71
    %p74 = scmp.ne.s32.totalorder %s59, %s73
    %p75 = scmp.eq.s32.totalorder %s14, 0
    %p76 = por %p74, %p75
    %s77 = ssub.s32 %s15, %s27
    %s78 = ssub.s32 %s16, %s23
    %s79 = sor.u32 %s77, %s78
    %p80 = scmp.eq.s32.totalorder %s79, 0
    %s82 = sadd.s32 %s81, 1
    %s83 = scalar_select %p80, %s81, %s82
    %p86 = pneg %p80
    %p87 = scmp.eq.s32.totalorder %s8, 1
    %p88 = por %p86, %p87
    %p89 = scmp.ne.s32.totalorder %s81, %s84
    %p90 = scmp.eq.s32.totalorder %s8, 0
    %p91 = por %p89, %p90
    %p92 = scmp.ne.s32.totalorder %s81, %s84
    %p93 = scmp.eq.s32.totalorder %s13, 1
    %p94 = por %p92, %p93
    %p95 = scmp.ne.s32.totalorder %s84, %s85
    %p96 = scmp.eq.s32.totalorder %s13, 0
    %p97 = por %p95, %p96
    %p98 = scmp.ne.s32.totalorder %s84, %s85
    %p99 = scmp.eq.s32.totalorder %s14, 1
    %p100 = por %p98, %p99
    %p102 = scmp.ne.s32.totalorder %s85, %s101
    %p103 = scmp.eq.s32.totalorder %s14, 0
    %p104 = por %p102, %p103
    %p105 = scmp.le.s32.totalorder 1, %s8
    %p106 = scmp.lt.s32.totalorder %s8, 3
    %p107 = pnand %p105, %p106
    %p108 = pneg %p107
    // Predicated region
    $region9: #{down_sequence_forward.4} parent=5 // pred_check
      _
    $region10: #{down_sequence_forward.4} parent=5 // pred_check_branch
      %110 = sbr.rel (%p107) target = $region12
    $region11: #{down_sequence_forward.4} parent=5 // pred_region
      %s111 = ssub.s32 %s8, 1
      // Predicated region
      $region13: #{down_sequence_forward.4} parent=11 // pred_check
        %p112 = pneg %p69
      $region14: #{down_sequence_forward.4} parent=11 // pred_check_branch
        %114 = sbr.rel (%p112) target = $region16
      $region15: #{down_sequence_forward.4} parent=11 // pred_region
        _
      $region16: #{down_sequence_forward.4} parent=11 // pred_fallthru
        _
    $region12: #{down_sequence_forward.4} parent=5 // pred_fallthru
      _
    %p115 = scmp.lt.s32.totalorder %s8, 2
    // Predicated region
    $region17: #{down_sequence_forward.4} parent=5 // pred_check
      %p116 = pneg %p115
    $region18: #{down_sequence_forward.4} parent=5 // pred_check_branch
      %118 = sbr.rel (%p116) target = $region20
    $region19: #{down_sequence_forward.4} parent=5 // pred_region
      // Predicated region
      $region21: #{down_sequence_forward.4} parent=19 // pred_check
        %p119 = pneg %p42
      $region22: #{down_sequence_forward.4} parent=19 // pred_check_branch
        %121 = sbr.rel (%p119) target = $region24
      $region23: #{down_sequence_forward.4} parent=19 // pred_region
        %p122 = scmp.lt.s32.totalorder %s15, 1
        %s123 = scalar_select %p122, %s15, 1
        %p124 = scmp.lt.s32.totalorder %s16, 0
        %s125 = scalar_select %p124, %s16, 0
        %s126 = smul.addr %s125, 5
        %s127 = smul.addr %s123, 5
        %s128 = sadd.s32 %s126, %s127
        %s129 = smul.addr %s128, 4
        %s130 = scalar_lea.vmem %s0, %s129
      $region24: #{down_sequence_forward.4} parent=19 // pred_fallthru
        _
    $region20: #{down_sequence_forward.4} parent=5 // pred_fallthru
      _
    %p131 = scmp.le.s32.totalorder 1, %s8
    %p132 = scmp.lt.s32.totalorder %s8, 3
    %p133 = pnand %p131, %p132
    %p134 = pneg %p133
    // Predicated region
    $region25: #{down_sequence_forward.4} parent=5 // pred_check
      _
    $region26: #{down_sequence_forward.4} parent=5 // pred_check_branch
      %136 = sbr.rel (%p133) target = $region28
    $region27: #{down_sequence_forward.4} parent=5 // pred_region
      %s137 = ssub.s32 %s8, 1
      %p138 = scmp.lt.s32.totalorder %s17, 1
      %s139 = scalar_select %p138, %s17, 1
      %p140 = scmp.lt.s32.totalorder %s18, 0
      %s141 = scalar_select %p140, %s18, 0
      %s142 = smul.addr %s141, 5
      %s143 = smul.addr %s139, 5
      %s144 = sadd.s32 %s142, %s143
      %s145 = smul.addr %s144, 4
      %s146 = scalar_lea.vmem %s0, %s145
      %p147 = pneg %p48
      %p148 = pneg %p45
      %p149 = pneg %p69
      %p150 = pneg %p66
      %p151 = pneg %p97
      %p152 = pneg %p94
      %s153 = smul.u32 2, %s18
      %p154 = scmp.lt.s32.totalorder %s17, 1
      %s155 = scalar_select %p154, %s17, 1
      %p156 = scmp.lt.s32.totalorder %s153, 1
      %s157 = scalar_select %p156, %s153, 1
      %s158 = smul.addr %s155, 2
      %s159 = sadd.s32 %s157, %s158
      %s160 = smul.addr %s159, 8
      %s161 = scalar_lea.vmem %s2, %s160
      %p162 = scmp.lt.s32.totalorder %s17, 1
      %s163 = scalar_select %p162, %s17, 1
      %p164 = scmp.lt.s32.totalorder %s18, 0
      %s165 = scalar_select %p164, %s18, 0
      %s166 = smul.addr %s165, 5
      %s167 = smul.addr %s163, 5
      %s168 = sadd.s32 %s166, %s167
      %s169 = smul.addr %s168, 4
      %s170 = scalar_lea.vmem %s0, %s169
      %s171 = smul.u32 2, %s18
      %p172 = scmp.lt.s32.totalorder %s17, 1
      %s173 = scalar_select %p172, %s17, 1
      %p174 = scmp.lt.s32.totalorder %s171, 1
      %s175 = scalar_select %p174, %s171, 1
      %s176 = smul.addr %s173, 2
      %s177 = sadd.s32 %s175, %s176
      %s178 = smul.addr %s177, 8
      %s179 = scalar_lea.vmem %s2, %s178
      %s180 = smul.u32 2, %s18
      %v182 = vld [vmem:[%s170] sm:$0x3]
      %v183 = vld [vmem:[%s170 + $0x4] sm:$0x3]
      %v184 = vld [vmem:[%s170 + $0x8] sm:$0x3]
      %v185 = vld [vmem:[%s170 + $0xc] sm:$0x3]
      %v186 = vld [vmem:[%s1] sm:$0xf]
      %v187 = vld [vmem:[%s1 + $0x4] sm:$0xf]
      %v188 = vld [vmem:[%s1 + $0x8] sm:$0xf]
      %v189 = vld [vmem:[%s1 + $0xc] sm:$0xf]
      %v190 = vld [vmem:[%s170] sm:$0x7]
      %v191 = vld [vmem:[%s170 + $0x4] sm:$0x7]
      %v192 = vld [vmem:[%s170 + $0x8] sm:$0x7]
      %v193 = vld [vmem:[%s170 + $0xc] sm:$0x7]
      %v199 = vunpack.c.l.s4 1983009808
      %v200 = vunpack.c.0.s8 %v199
      %v201 = vlaneseq
      %v202 = vshrl.u32 %v201, 7
      %v203 = vsub.s32 %v200, %v202
      %v204 = vrot.slane %v190, %v203
      %v205 = vcombine.high %v204, %v204
      %v207 = vunpack.c.l.s4 1983009808
      %v208 = vunpack.c.0.s8 %v207
      %v209 = vlaneseq
      %v210 = vshrl.u32 %v209, 7
      %v211 = vsub.s32 %v208, %v210
      %v212 = vrot.slane %v191, %v211
      %v213 = vcombine.high %v212, %v212
      %v215 = vunpack.c.l.s4 1983009808
      %v216 = vunpack.c.0.s8 %v215
      %v217 = vlaneseq
      %v218 = vshrl.u32 %v217, 7
      %v219 = vsub.s32 %v216, %v218
      %v220 = vrot.slane %v192, %v219
      %v221 = vcombine.high %v220, %v220
      %v223 = vunpack.c.l.s4 1983009808
      %v224 = vunpack.c.0.s8 %v223
      %v225 = vlaneseq
      %v226 = vshrl.u32 %v225, 7
      %v227 = vsub.s32 %v224, %v226
      %v228 = vrot.slane %v193, %v227
      %v229 = vcombine.high %v228, %v228
      %vm230 = vsmask.f32 1280
      %vm231 = vsmask.f32 3336
      %vm232 = vmor %vm230, %vm231
      %vm233 = vsmask.f32 5392
      %vm234 = vmor %vm232, %vm233
      %vm235 = vsmask.f32 7448
      %vm236 = vmor %vm234, %vm235
      %v238 = vshrl.u32 %v204, 16
      %v240 = vrot.slane %v238, 6
      %v241 = vshll.u32 %v204, 16
      %v243 = vrot.slane %v241, 7
      %v244 = vor.u32 %v240, %v243
      %v245 = vrot.slane %v244, 2
      %v247 = vshll.u32 %v205, 16
      %v249 = vrot.slane %v247, 7
      %v250 = vsel %vm236, %v245, %v249
      %v252 = vshrl.u32 %v212, 16
      %v254 = vrot.slane %v252, 6
      %v255 = vshll.u32 %v212, 16
      %v257 = vrot.slane %v255, 7
      %v258 = vor.u32 %v254, %v257
      %v259 = vrot.slane %v258, 2
      %v261 = vshll.u32 %v213, 16
      %v263 = vrot.slane %v261, 7
      %v264 = vsel %vm236, %v259, %v263
      %v266 = vshrl.u32 %v220, 16
      %v268 = vrot.slane %v266, 6
      %v269 = vshll.u32 %v220, 16
      %v271 = vrot.slane %v269, 7
      %v272 = vor.u32 %v268, %v271
      %v273 = vrot.slane %v272, 2
      %v275 = vshll.u32 %v221, 16
      %v277 = vrot.slane %v275, 7
      %v278 = vsel %vm236, %v273, %v277
      %v280 = vshrl.u32 %v228, 16
      %v282 = vrot.slane %v280, 6
      %v283 = vshll.u32 %v228, 16
      %v285 = vrot.slane %v283, 7
      %v286 = vor.u32 %v282, %v285
      %v287 = vrot.slane %v286, 2
      %v289 = vshll.u32 %v229, 16
      %v291 = vrot.slane %v289, 7
      %v292 = vsel %vm236, %v287, %v291
      %s293 = scalar_lea.vmem %s1, 16
      %v294 = vld [vmem:[%s293] sm:$0xf]
      %v295 = vld [vmem:[%s293 + $0x4] sm:$0xf]
      %v296 = vld [vmem:[%s293 + $0x8] sm:$0xf]
      %v297 = vld [vmem:[%s293 + $0xc] sm:$0xf]
      %v298 = vcombine.low %v250, %v264
      %v299 = vcombine.low %v278, %v292
      %v301 = vunpack.c.l.s4 1983009808
      %v302 = vunpack.c.0.s8 %v301
      %v303 = vlaneseq
      %v304 = vshrl.u32 %v303, 7
      %v305 = vsub.s32 %v302, %v304
      %v306 = vrot.slane %v298, %v305
      %v308 = vunpack.c.l.s4 1983009808
      %v309 = vunpack.c.0.s8 %v308
      %v310 = vlaneseq
      %v311 = vshrl.u32 %v310, 7
      %v312 = vsub.s32 %v309, %v311
      %v313 = vrot.slane %v299, %v312
      %v314 = vcombine.low %v306, %v313
      %v319 = vunpack.c.l.b16 %v294
      %v320 = vunpack.c.l.b16 %v295
      %v321 = vunpack.c.l.b16 %v296
      %v322 = vunpack.c.l.b16 %v297
      %v323 = vpack.c.b16 %v320, %v319
      %v324 = vpack.c.b16 %v322, %v321
      %vm327 = vcmask 261120
      %v329 = vsel %vm327, %v314, 0
      %331 = vmatprep.subr.bf16.mxu0 0
      %332 = vmatpush1.bf16.msra.mxu0 0
      %333 = vmatprep.subr.bf16.mxu0 0
      %334 = vmatpush1.bf16.msra.mxu0 0
      %335 = vmatprep.subr.bf16.mxu0 0
      %336 = vmatpush1.bf16.msra.mxu0 0
      %337 = vmatprep.subr.bf16.mxu0 0
      %338 = vmatpush1.bf16.msra.mxu0 0
      %339 = vmatprep.subr.bf16.mxu0 0
      %340 = vmatpush1.bf16.msra.mxu0 0
      %341 = vmatprep.subr.bf16.mxu0 0
      %342 = vmatpush1.bf16.msra.mxu0 0
      %343 = vmatprep.subr.bf16.mxu0 0
      %344 = vmatpush1.bf16.msra.mxu0 %v324
      %345 = vmatprep.subr.bf16.mxu0 0
      %346 = vmatpush1.bf16.msra.mxu0 %v323
      %347 = vmatprep.subr.bf16.mxu0 0
      %348 = vmatpush2.bf16.msra.mxu0 0
      %349 = vmatprep.subr.bf16.mxu0 0
      %350 = vmatpush2.bf16.msra.mxu0 0
      %351 = vmatprep.subr.bf16.mxu0 0
      %352 = vmatpush2.bf16.msra.mxu0 0
      %353 = vmatprep.subr.bf16.mxu0 0
      %354 = vmatpush2.bf16.msra.mxu0 0
      %355 = vmatprep.subr.bf16.mxu0 0
      %356 = vmatpush2.bf16.msra.mxu0 0
      %357 = vmatprep.subr.bf16.mxu0 0
      %358 = vmatpush2.bf16.msra.mxu0 0
      %359 = vmatprep.subr.bf16.mxu0 0
      %360 = vmatpush2.bf16.msra.mxu0 0
      %361 = vmatprep.subr.bf16.mxu0 0
      %362 = vmatpush2.bf16.msra.mxu0 0
      %363 = vmatprep.mubr.bf16.mxu0 0
      %364 = vmatmul.mubr.bf16.gmra.mxu0 %v329
      %v365 = vpop.f32.mrf.mxu0
      %v366 = vadd.f32 0.0, %v365
      %v367 = vpop.f32.mrf.mxu0
      %v368 = vpop.f32.mrf.mxu0
      %v369 = vadd.f32 0.0, %v368
      %v370 = vpop.f32.mrf.mxu0
      %371 = vdwg.mxu0
      %v376 = vcombine.low %v182, %v183
      %v377 = vcombine.low %v184, %v185
      %v379 = vunpack.c.l.s4 1983009808
      %v380 = vunpack.c.0.s8 %v379
      %v381 = vlaneseq
      %v382 = vshrl.u32 %v381, 7
      %v383 = vsub.s32 %v380, %v382
      %v384 = vrot.slane %v376, %v383
      %v386 = vunpack.c.l.s4 1983009808
      %v387 = vunpack.c.0.s8 %v386
      %v388 = vlaneseq
      %v389 = vshrl.u32 %v388, 7
      %v390 = vsub.s32 %v387, %v389
      %v391 = vrot.slane %v377, %v390
      %v392 = vcombine.low %v384, %v391
      %v397 = vunpack.c.l.b16 %v186
      %v398 = vunpack.c.l.b16 %v187
      %v399 = vunpack.c.l.b16 %v188
      %v400 = vunpack.c.l.b16 %v189
      %v401 = vpack.c.b16 %v398, %v397
      %v402 = vpack.c.b16 %v400, %v399
      %v406 = vsel %vm327, %v392, 0
      %408 = vmatprep.subr.bf16.mxu0 0
      %409 = vmatpush1.bf16.msra.mxu0 0
      %410 = vmatprep.subr.bf16.mxu0 0
      %411 = vmatpush1.bf16.msra.mxu0 0
      %412 = vmatprep.subr.bf16.mxu0 0
      %413 = vmatpush1.bf16.msra.mxu0 0
      %414 = vmatprep.subr.bf16.mxu0 0
      %415 = vmatpush1.bf16.msra.mxu0 0
      %416 = vmatprep.subr.bf16.mxu0 0
      %417 = vmatpush1.bf16.msra.mxu0 0
      %418 = vmatprep.subr.bf16.mxu0 0
      %419 = vmatpush1.bf16.msra.mxu0 0
      %420 = vmatprep.subr.bf16.mxu0 0
      %421 = vmatpush1.bf16.msra.mxu0 %v402
      %422 = vmatprep.subr.bf16.mxu0 0
      %423 = vmatpush1.bf16.msra.mxu0 %v401
      %424 = vmatprep.subr.bf16.mxu0 0
      %425 = vmatpush2.bf16.msra.mxu0 0
      %426 = vmatprep.subr.bf16.mxu0 0
      %427 = vmatpush2.bf16.msra.mxu0 0
      %428 = vmatprep.subr.bf16.mxu0 0
      %429 = vmatpush2.bf16.msra.mxu0 0
      %430 = vmatprep.subr.bf16.mxu0 0
      %431 = vmatpush2.bf16.msra.mxu0 0
      %432 = vmatprep.subr.bf16.mxu0 0
      %433 = vmatpush2.bf16.msra.mxu0 0
      %434 = vmatprep.subr.bf16.mxu0 0
      %435 = vmatpush2.bf16.msra.mxu0 0
      %436 = vmatprep.subr.bf16.mxu0 0
      %437 = vmatpush2.bf16.msra.mxu0 0
      %438 = vmatprep.subr.bf16.mxu0 0
      %439 = vmatpush2.bf16.msra.mxu0 0
      %440 = vmatprep.mubr.bf16.mxu0 0
      %441 = vmatmul.mubr.bf16.gmra.mxu0 %v406
      %v442 = vpop.f32.mrf.mxu0
      %v443 = vadd.f32 %v366, %v442
      %v444 = vpop.f32.mrf.mxu0
      %v445 = vpop.f32.mrf.mxu0
      %v446 = vadd.f32 %v369, %v445
      %v447 = vpop.f32.mrf.mxu0
      %448 = vdwg.mxu0
      %s449 = scalar_lea.vmem %s170, 4
      %v450 = vld [vmem:[%s449] sm:$0x3]
      %v451 = vld [vmem:[%s449 + $0x4] sm:$0x3]
      %v452 = vld [vmem:[%s449 + $0x8] sm:$0x3]
      %v453 = vld [vmem:[%s449 + $0xc] sm:$0x3]
      %s454 = scalar_lea.vmem %s1, 32
      %v455 = vld [vmem:[%s454] sm:$0xf]
      %v456 = vld [vmem:[%s454 + $0x4] sm:$0xf]
      %v457 = vld [vmem:[%s454 + $0x8] sm:$0xf]
      %v458 = vld [vmem:[%s454 + $0xc] sm:$0xf]
      %v463 = vcombine.low %v450, %v451
      %v464 = vcombine.low %v452, %v453
      %v466 = vunpack.c.l.s4 1983009808
      %v467 = vunpack.c.0.s8 %v466
      %v468 = vlaneseq
      %v469 = vshrl.u32 %v468, 7
      %v470 = vsub.s32 %v467, %v469
      %v471 = vrot.slane %v463, %v470
      %v473 = vunpack.c.l.s4 1983009808
      %v474 = vunpack.c.0.s8 %v473
      %v475 = vlaneseq
      %v476 = vshrl.u32 %v475, 7
      %v477 = vsub.s32 %v474, %v476
      %v478 = vrot.slane %v464, %v477
      %v479 = vcombine.low %v471, %v478
      %v484 = vunpack.c.l.b16 %v455
      %v485 = vunpack.c.l.b16 %v456
      %v486 = vunpack.c.l.b16 %v457
      %v487 = vunpack.c.l.b16 %v458
      %v488 = vpack.c.b16 %v485, %v484
      %v489 = vpack.c.b16 %v487, %v486
      %v493 = vsel %vm327, %v479, 0
      %495 = vmatprep.subr.bf16.mxu0 0
      %496 = vmatpush1.bf16.msra.mxu0 0
      %497 = vmatprep.subr.bf16.mxu0 0
      %498 = vmatpush1.bf16.msra.mxu0 0
      %499 = vmatprep.subr.bf16.mxu0 0
      %500 = vmatpush1.bf16.msra.mxu0 0
      %501 = vmatprep.subr.bf16.mxu0 0
      %502 = vmatpush1.bf16.msra.mxu0 0
      %503 = vmatprep.subr.bf16.mxu0 0
      %504 = vmatpush1.bf16.msra.mxu0 0
      %505 = vmatprep.subr.bf16.mxu0 0
      %506 = vmatpush1.bf16.msra.mxu0 0
      %507 = vmatprep.subr.bf16.mxu0 0
      %508 = vmatpush1.bf16.msra.mxu0 %v489
      %509 = vmatprep.subr.bf16.mxu0 0
      %510 = vmatpush1.bf16.msra.mxu0 %v488
      %511 = vmatprep.subr.bf16.mxu0 0
      %512 = vmatpush2.bf16.msra.mxu0 0
      %513 = vmatprep.subr.bf16.mxu0 0
      %514 = vmatpush2.bf16.msra.mxu0 0
      %515 = vmatprep.subr.bf16.mxu0 0
      %516 = vmatpush2.bf16.msra.mxu0 0
      %517 = vmatprep.subr.bf16.mxu0 0
      %518 = vmatpush2.bf16.msra.mxu0 0
      %519 = vmatprep.subr.bf16.mxu0 0
      %520 = vmatpush2.bf16.msra.mxu0 0
      %521 = vmatprep.subr.bf16.mxu0 0
      %522 = vmatpush2.bf16.msra.mxu0 0
      %523 = vmatprep.subr.bf16.mxu0 0
      %524 = vmatpush2.bf16.msra.mxu0 0
      %525 = vmatprep.subr.bf16.mxu0 0
      %526 = vmatpush2.bf16.msra.mxu0 0
      %527 = vmatprep.mubr.bf16.mxu0 0
      %528 = vmatmul.mubr.bf16.gmra.mxu0 %v493
      %v529 = vpop.f32.mrf.mxu0
      %v530 = vadd.f32 0.0, %v529
      %v531 = vpop.f32.mrf.mxu0
      %v532 = vpop.f32.mrf.mxu0
      %v533 = vadd.f32 0.0, %v532
      %v534 = vpop.f32.mrf.mxu0
      %535 = vdwg.mxu0
      %v536 = vadd.f32 %v443, %v530
      %v537 = vadd.f32 %v446, %v533
      %v538 = vld [vmem:[%s449] sm:$0x7]
      %v539 = vld [vmem:[%s449 + $0x4] sm:$0x7]
      %v540 = vld [vmem:[%s449 + $0x8] sm:$0x7]
      %v541 = vld [vmem:[%s449 + $0xc] sm:$0x7]
      %v547 = vunpack.c.l.s4 1983009808
      %v548 = vunpack.c.0.s8 %v547
      %v549 = vlaneseq
      %v550 = vshrl.u32 %v549, 7
      %v551 = vsub.s32 %v548, %v550
      %v552 = vrot.slane %v538, %v551
      %v553 = vcombine.high %v552, %v552
      %v555 = vunpack.c.l.s4 1983009808
      %v556 = vunpack.c.0.s8 %v555
      %v557 = vlaneseq
      %v558 = vshrl.u32 %v557, 7
      %v559 = vsub.s32 %v556, %v558
      %v560 = vrot.slane %v539, %v559
      %v561 = vcombine.high %v560, %v560
      %v563 = vunpack.c.l.s4 1983009808
      %v564 = vunpack.c.0.s8 %v563
      %v565 = vlaneseq
      %v566 = vshrl.u32 %v565, 7
      %v567 = vsub.s32 %v564, %v566
      %v568 = vrot.slane %v540, %v567
      %v569 = vcombine.high %v568, %v568
      %v571 = vunpack.c.l.s4 1983009808
      %v572 = vunpack.c.0.s8 %v571
      %v573 = vlaneseq
      %v574 = vshrl.u32 %v573, 7
      %v575 = vsub.s32 %v572, %v574
      %v576 = vrot.slane %v541, %v575
      %v577 = vcombine.high %v576, %v576
      %v579 = vshrl.u32 %v552, 16
      %v581 = vrot.slane %v579, 6
      %v582 = vshll.u32 %v552, 16
      %v584 = vrot.slane %v582, 7
      %v585 = vor.u32 %v581, %v584
      %v586 = vrot.slane %v585, 2
      %v588 = vshll.u32 %v553, 16
      %v590 = vrot.slane %v588, 7
      %v591 = vsel %vm236, %v586, %v590
      %v593 = vshrl.u32 %v560, 16
      %v595 = vrot.slane %v593, 6
      %v596 = vshll.u32 %v560, 16
      %v598 = vrot.slane %v596, 7
      %v599 = vor.u32 %v595, %v598
      %v600 = vrot.slane %v599, 2
      %v602 = vshll.u32 %v561, 16
      %v604 = vrot.slane %v602, 7
      %v605 = vsel %vm236, %v600, %v604
      %v607 = vshrl.u32 %v568, 16
      %v609 = vrot.slane %v607, 6
      %v610 = vshll.u32 %v568, 16
      %v612 = vrot.slane %v610, 7
      %v613 = vor.u32 %v609, %v612
      %v614 = vrot.slane %v613, 2
      %v616 = vshll.u32 %v569, 16
      %v618 = vrot.slane %v616, 7
      %v619 = vsel %vm236, %v614, %v618
      %v621 = vshrl.u32 %v576, 16
      %v623 = vrot.slane %v621, 6
      %v624 = vshll.u32 %v576, 16
      %v626 = vrot.slane %v624, 7
      %v627 = vor.u32 %v623, %v626
      %v628 = vrot.slane %v627, 2
      %v630 = vshll.u32 %v577, 16
      %v632 = vrot.slane %v630, 7
      %v633 = vsel %vm236, %v628, %v632
      %s634 = scalar_lea.vmem %s1, 48
      %v635 = vld [vmem:[%s634] sm:$0xf]
      %v636 = vld [vmem:[%s634 + $0x4] sm:$0xf]
      %v637 = vld [vmem:[%s634 + $0x8] sm:$0xf]
      %v638 = vld [vmem:[%s634 + $0xc] sm:$0xf]
      %v639 = vcombine.low %v591, %v605
      %v640 = vcombine.low %v619, %v633
      %v642 = vunpack.c.l.s4 1983009808
      %v643 = vunpack.c.0.s8 %v642
      %v644 = vlaneseq
      %v645 = vshrl.u32 %v644, 7
      %v646 = vsub.s32 %v643, %v645
      %v647 = vrot.slane %v639, %v646
      %v649 = vunpack.c.l.s4 1983009808
      %v650 = vunpack.c.0.s8 %v649
      %v651 = vlaneseq
      %v652 = vshrl.u32 %v651, 7
      %v653 = vsub.s32 %v650, %v652
      %v654 = vrot.slane %v640, %v653
      %v655 = vcombine.low %v647, %v654
      %v660 = vunpack.c.l.b16 %v635
      %v661 = vunpack.c.l.b16 %v636
      %v662 = vunpack.c.l.b16 %v637
      %v663 = vunpack.c.l.b16 %v638
      %v664 = vpack.c.b16 %v661, %v660
      %v665 = vpack.c.b16 %v663, %v662
      %v669 = vsel %vm327, %v655, 0
      %671 = vmatprep.subr.bf16.mxu0 0
      %672 = vmatpush1.bf16.msra.mxu0 0
      %673 = vmatprep.subr.bf16.mxu0 0
      %674 = vmatpush1.bf16.msra.mxu0 0
      %675 = vmatprep.subr.bf16.mxu0 0
      %676 = vmatpush1.bf16.msra.mxu0 0
      %677 = vmatprep.subr.bf16.mxu0 0
      %678 = vmatpush1.bf16.msra.mxu0 0
      %679 = vmatprep.subr.bf16.mxu0 0
      %680 = vmatpush1.bf16.msra.mxu0 0
      %681 = vmatprep.subr.bf16.mxu0 0
      %682 = vmatpush1.bf16.msra.mxu0 0
      %683 = vmatprep.subr.bf16.mxu0 0
      %684 = vmatpush1.bf16.msra.mxu0 %v665
      %685 = vmatprep.subr.bf16.mxu0 0
      %686 = vmatpush1.bf16.msra.mxu0 %v664
      %687 = vmatprep.subr.bf16.mxu0 0
      %688 = vmatpush2.bf16.msra.mxu0 0
      %689 = vmatprep.subr.bf16.mxu0 0
      %690 = vmatpush2.bf16.msra.mxu0 0
      %691 = vmatprep.subr.bf16.mxu0 0
      %692 = vmatpush2.bf16.msra.mxu0 0
      %693 = vmatprep.subr.bf16.mxu0 0
      %694 = vmatpush2.bf16.msra.mxu0 0
      %695 = vmatprep.subr.bf16.mxu0 0
      %696 = vmatpush2.bf16.msra.mxu0 0
      %697 = vmatprep.subr.bf16.mxu0 0
      %698 = vmatpush2.bf16.msra.mxu0 0
      %699 = vmatprep.subr.bf16.mxu0 0
      %700 = vmatpush2.bf16.msra.mxu0 0
      %701 = vmatprep.subr.bf16.mxu0 0
      %702 = vmatpush2.bf16.msra.mxu0 0
      %703 = vmatprep.mubr.bf16.mxu0 0
      %704 = vmatmul.mubr.bf16.gmra.mxu0 %v669
      %v705 = vpop.f32.mrf.mxu0
      %v706 = vadd.f32 0.0, %v705
      %v707 = vpop.f32.mrf.mxu0
      %v708 = vpop.f32.mrf.mxu0
      %v709 = vadd.f32 0.0, %v708
      %v710 = vpop.f32.mrf.mxu0
      %711 = vdwg.mxu0
      %v712 = vadd.f32 %v536, %v706
      %v713 = vadd.f32 %v537, %v709
      %vm714 = vcmp.gt.f32.partialorder %v712, 0.0
      %vm715 = vcmp.gt.f32.partialorder %v713, 0.0
      %v716 = vmul.f32 %v712, 0.01
      %v717 = vmul.f32 %v713, 0.01
      %v718 = vsel %vm714, %v712, %v716
      %v719 = vsel %vm715, %v713, %v717
      %vm720 = vcmask 130048
      %721 = vst.msk [vmem:[%s179] sm:$0xff] %vm720, %v718
      %722 = vst.msk [vmem:[%s179 + $0x8] sm:$0xff] %vm720, %v719
      %s723 = smul.u32 2, %s18
      %p724 = scmp.lt.s32.totalorder %s17, 1
      %s725 = scalar_select %p724, %s17, 1
      %p726 = scmp.lt.s32.totalorder %s723, 1
      %s727 = scalar_select %p726, %s723, 1
      %s728 = smul.addr %s725, 2
      %s729 = sadd.s32 %s727, %s728
      %s730 = smul.addr %s729, 8
      %s731 = scalar_lea.vmem %s2, %s730
      // Predicated region
      $region29: #{down_sequence_forward.4} parent=27 // pred_check
        %p732 = pneg %p94
      $region30: #{down_sequence_forward.4} parent=27 // pred_check_branch
        %734 = sbr.rel (%p732) target = $region32
      $region31: #{down_sequence_forward.4} parent=27 // pred_region
        %s735 = smul.u32 2, %s18
      $region32: #{down_sequence_forward.4} parent=27 // pred_fallthru
        _
    $region28: #{down_sequence_forward.4} parent=5 // pred_fallthru
      _
    %p736 = scmp.le.s32.totalorder 2, %s8
    // Predicated region
    $region33: #{down_sequence_forward.4} parent=5 // pred_check
      %p737 = pneg %p736
    $region34: #{down_sequence_forward.4} parent=5 // pred_check_branch
      %739 = sbr.rel (%p737) target = $region36
    $region35: #{down_sequence_forward.4} parent=5 // pred_region
      %s740 = ssub.s32 %s8, 2
      // Predicated region
      $region37: #{down_sequence_forward.4} parent=35 // pred_check
        %p741 = pneg %p100
      $region38: #{down_sequence_forward.4} parent=35 // pred_check_branch
        %743 = sbr.rel (%p741) target = $region40
      $region39: #{down_sequence_forward.4} parent=35 // pred_region
        %s744 = smul.u32 2, %s20
        %p745 = scmp.lt.s32.totalorder %s19, 1
        %s746 = scalar_select %p745, %s19, 1
        %p747 = scmp.lt.s32.totalorder %s744, 1
        %s748 = scalar_select %p747, %s744, 1
        %s749 = smul.addr %s746, 2
        %s750 = sadd.s32 %s748, %s749
        %s751 = smul.addr %s750, 8
        %s752 = scalar_lea.vmem %s2, %s751
      $region40: #{down_sequence_forward.4} parent=35 // pred_fallthru
        _
    $region36: #{down_sequence_forward.4} parent=5 // pred_fallthru
      _
  $region6: #{down_sequence_forward.4} parent=0 // loop_footer
    %s12 = sadd.s32 1, %s8
  $region7: #{down_sequence_forward.4} parent=0 // loop_footer_branch
    %7 = sbr.rel target = $region3
  $region8: #{down_sequence_forward.4} parent=0 // loop_exit
    _

// kernel: down_sequence_forward.5
$region0: #{down_sequence_forward.5}
  #allocation0 [shape = 'u32[]', space=smem, size = 0x4, offset = 0x4, fixed_abs, tag = 'smem constant byte address 0x4 - core index']
  #allocation1 [shape = 'u32[144,128]{1,0:T(1,128)}', space=vmem, size = 0x12000, scoped, tag = 'internal scratch']
  %s0 = inlined_call_operand.vmem [shape: bf16[2,1,5,3,64], index: 0, kind: input, shape index: {}]
  %s1 = inlined_call_operand.vmem [shape: bf16[4,64,16], index: 1, kind: input, shape index: {}]
  %s2 = inlined_call_operand.vmem [shape: f32[2,8,16], index: 2, kind: output, shape index: {}]
  %s3 = sld [smem:[#allocation0]]
  $region41: #{down_sequence_forward.5} parent=0
    _
  %s5 = ssub.s32 1, %s3
  %s6 = scalar_select 0, %s5, %s3
  loop: start=0, step=1, limit=4
  $region2: #{down_sequence_forward.5} parent=0 // loop_pre_header
    _
  $region3: #{down_sequence_forward.5} parent=0 // loop_header
    %s8 = sphi 0, %s12
    %p9 = scmp.ge.s32.totalorder %s8, 4
    %s15 = sphi 0, %s27
    %s16 = sphi 0, %s23
    %s17 = sphi 0, %s15
    %s18 = sphi 0, %s16
    %s19 = sphi 0, %s17
    %s20 = sphi 0, %s18
    %s32 = sphi 0, %s34
    %s35 = sphi 0, %s32
    %s36 = sphi 0, %s35
    %s52 = sphi 0, %s36
    %s56 = sphi 0, %s56
    %s58 = sphi 0, %s56
    %s59 = sphi 0, %s58
    %s73 = sphi 0, %s59
    %s81 = sphi 0, %s83
    %s84 = sphi 0, %s81
    %s85 = sphi 0, %s84
    %s101 = sphi 0, %s85
  $region4: #{down_sequence_forward.5} parent=0 // loop_header_branch
    %11 = sbr.rel (%p9) target = $region8
  $region5: #{down_sequence_forward.5} parent=0 // loop_body
    %s13 = ssub.s32 %s8, 1
    %s14 = ssub.s32 %s8, 2
    %s21 = sadd.s32 1, %s16
    %p22 = scmp.ge.s32.totalorder %s21, 1
    %s23 = scalar_select %p22, 0, %s21
    %s24 = sadd.s32 1, %s15
    %s25 = scalar_select %p22, %s24, %s15
    %p26 = scmp.ge.s32.totalorder %s25, 2
    %s27 = scalar_select %p26, 0, %s25
    %s28 = ssub.s32 %s15, %s27
    %s29 = ssub.s32 %s16, %s23
    %s30 = sor.u32 %s28, %s29
    %p31 = scmp.eq.s32.totalorder %s30, 0
    %s33 = sadd.s32 %s32, 1
    %s34 = scalar_select %p31, %s32, %s33
    %p37 = pneg %p31
    %p38 = scmp.eq.s32.totalorder %s8, 1
    %p39 = por %p37, %p38
    %p40 = scmp.ne.s32.totalorder %s32, %s35
    %p41 = scmp.eq.s32.totalorder %s8, 0
    %p42 = por %p40, %p41
    %p43 = scmp.ne.s32.totalorder %s32, %s35
    %p44 = scmp.eq.s32.totalorder %s13, 1
    %p45 = por %p43, %p44
    %p46 = scmp.ne.s32.totalorder %s35, %s36
    %p47 = scmp.eq.s32.totalorder %s13, 0
    %p48 = por %p46, %p47
    %p49 = scmp.ne.s32.totalorder %s35, %s36
    %p50 = scmp.eq.s32.totalorder %s14, 1
    %p51 = por %p49, %p50
    %p53 = scmp.ne.s32.totalorder %s36, %s52
    %p54 = scmp.eq.s32.totalorder %s14, 0
    %p55 = por %p53, %p54
    %s57 = sadd.s32 %s56, 1
    %p60 = scmp.eq.s32.totalorder %s8, 1
    %p61 = scmp.ne.s32.totalorder %s56, %s58
    %p62 = scmp.eq.s32.totalorder %s8, 0
    %p63 = por %p61, %p62
    %p64 = scmp.ne.s32.totalorder %s56, %s58
    %p65 = scmp.eq.s32.totalorder %s13, 1
    %p66 = por %p64, %p65
    %p67 = scmp.ne.s32.totalorder %s58, %s59
    %p68 = scmp.eq.s32.totalorder %s13, 0
    %p69 = por %p67, %p68
    %p70 = scmp.ne.s32.totalorder %s58, %s59
    %p71 = scmp.eq.s32.totalorder %s14, 1
    %p72 = por %p70, %p71
    %p74 = scmp.ne.s32.totalorder %s59, %s73
    %p75 = scmp.eq.s32.totalorder %s14, 0
    %p76 = por %p74, %p75
    %s77 = ssub.s32 %s15, %s27
    %s78 = ssub.s32 %s16, %s23
    %s79 = sor.u32 %s77, %s78
    %p80 = scmp.eq.s32.totalorder %s79, 0
    %s82 = sadd.s32 %s81, 1
    %s83 = scalar_select %p80, %s81, %s82
    %p86 = pneg %p80
    %p87 = scmp.eq.s32.totalorder %s8, 1
    %p88 = por %p86, %p87
    %p89 = scmp.ne.s32.totalorder %s81, %s84
    %p90 = scmp.eq.s32.totalorder %s8, 0
    %p91 = por %p89, %p90
    %p92 = scmp.ne.s32.totalorder %s81, %s84
    %p93 = scmp.eq.s32.totalorder %s13, 1
    %p94 = por %p92, %p93
    %p95 = scmp.ne.s32.totalorder %s84, %s85
    %p96 = scmp.eq.s32.totalorder %s13, 0
    %p97 = por %p95, %p96
    %p98 = scmp.ne.s32.totalorder %s84, %s85
    %p99 = scmp.eq.s32.totalorder %s14, 1
    %p100 = por %p98, %p99
    %p102 = scmp.ne.s32.totalorder %s85, %s101
    %p103 = scmp.eq.s32.totalorder %s14, 0
    %p104 = por %p102, %p103
    %p105 = scmp.le.s32.totalorder 1, %s8
    %p106 = scmp.lt.s32.totalorder %s8, 3
    %p107 = pnand %p105, %p106
    %p108 = pneg %p107
    // Predicated region
    $region9: #{down_sequence_forward.5} parent=5 // pred_check
      _
    $region10: #{down_sequence_forward.5} parent=5 // pred_check_branch
      %110 = sbr.rel (%p107) target = $region12
    $region11: #{down_sequence_forward.5} parent=5 // pred_region
      %s111 = ssub.s32 %s8, 1
      // Predicated region
      $region13: #{down_sequence_forward.5} parent=11 // pred_check
        %p112 = pneg %p69
      $region14: #{down_sequence_forward.5} parent=11 // pred_check_branch
        %114 = sbr.rel (%p112) target = $region16
      $region15: #{down_sequence_forward.5} parent=11 // pred_region
        _
      $region16: #{down_sequence_forward.5} parent=11 // pred_fallthru
        _
    $region12: #{down_sequence_forward.5} parent=5 // pred_fallthru
      _
    %p115 = scmp.lt.s32.totalorder %s8, 2
    // Predicated region
    $region17: #{down_sequence_forward.5} parent=5 // pred_check
      %p116 = pneg %p115
    $region18: #{down_sequence_forward.5} parent=5 // pred_check_branch
      %118 = sbr.rel (%p116) target = $region20
    $region19: #{down_sequence_forward.5} parent=5 // pred_region
      // Predicated region
      $region21: #{down_sequence_forward.5} parent=19 // pred_check
        %p119 = pneg %p42
      $region22: #{down_sequence_forward.5} parent=19 // pred_check_branch
        %121 = sbr.rel (%p119) target = $region24
      $region23: #{down_sequence_forward.5} parent=19 // pred_region
        %p122 = scmp.lt.s32.totalorder %s15, 1
        %s123 = scalar_select %p122, %s15, 1
        %p124 = scmp.lt.s32.totalorder %s16, 0
        %s125 = scalar_select %p124, %s16, 0
        %s126 = smul.addr %s125, 5
        %s127 = smul.addr %s123, 5
        %s128 = sadd.s32 %s126, %s127
        %s129 = smul.addr %s128, 2
        %s130 = scalar_lea.vmem %s0, %s129
      $region24: #{down_sequence_forward.5} parent=19 // pred_fallthru
        _
    $region20: #{down_sequence_forward.5} parent=5 // pred_fallthru
      _
    %p131 = scmp.le.s32.totalorder 1, %s8
    %p132 = scmp.lt.s32.totalorder %s8, 3
    %p133 = pnand %p131, %p132
    %p134 = pneg %p133
    // Predicated region
    $region25: #{down_sequence_forward.5} parent=5 // pred_check
      _
    $region26: #{down_sequence_forward.5} parent=5 // pred_check_branch
      %136 = sbr.rel (%p133) target = $region28
    $region27: #{down_sequence_forward.5} parent=5 // pred_region
      %s137 = ssub.s32 %s8, 1
      %p138 = scmp.lt.s32.totalorder %s17, 1
      %s139 = scalar_select %p138, %s17, 1
      %p140 = scmp.lt.s32.totalorder %s18, 0
      %s141 = scalar_select %p140, %s18, 0
      %s142 = smul.addr %s141, 5
      %s143 = smul.addr %s139, 5
      %s144 = sadd.s32 %s142, %s143
      %s145 = smul.addr %s144, 2
      %s146 = scalar_lea.vmem %s0, %s145
      %p147 = pneg %p48
      %p148 = pneg %p45
      %p149 = pneg %p69
      %p150 = pneg %p66
      %p151 = pneg %p97
      %p152 = pneg %p94
      %p153 = scmp.lt.s32.totalorder %s17, 1
      %s154 = scalar_select %p153, %s17, 1
      %p155 = scmp.lt.s32.totalorder %s18, 0
      %s156 = scalar_select %p155, %s18, 0
      %s157 = sadd.s32 %s156, %s154
      %s158 = smul.addr %s157, 8
      %s159 = scalar_lea.vmem %s2, %s158
      %p160 = scmp.lt.s32.totalorder %s17, 1
      %s161 = scalar_select %p160, %s17, 1
      %p162 = scmp.lt.s32.totalorder %s18, 0
      %s163 = scalar_select %p162, %s18, 0
      %s164 = smul.addr %s163, 5
      %s165 = smul.addr %s161, 5
      %s166 = sadd.s32 %s164, %s165
      %s167 = smul.addr %s166, 2
      %s168 = scalar_lea.vmem %s0, %s167
      %p169 = scmp.lt.s32.totalorder %s17, 1
      %s170 = scalar_select %p169, %s17, 1
      %p171 = scmp.lt.s32.totalorder %s18, 0
      %s172 = scalar_select %p171, %s18, 0
      %s173 = sadd.s32 %s172, %s170
      %s174 = smul.addr %s173, 8
      %s175 = scalar_lea.vmem %s2, %s174
      %v177 = vld [vmem:[%s168] sm:$0x1]
      %v178 = vld [vmem:[%s168 + $0x2] sm:$0x1]
      %v179 = vld [vmem:[%s168 + $0x4] sm:$0x1]
      %v180 = vld [vmem:[%s168 + $0x6] sm:$0x1]
      %v181 = vld [vmem:[%s1] sm:$0xf]
      %v182 = vld [vmem:[%s1 + $0x4] sm:$0xf]
      %v183 = vld [vmem:[%s1 + $0x8] sm:$0xf]
      %v184 = vld [vmem:[%s1 + $0xc] sm:$0xf]
      %v185 = vld [vmem:[%s1 + $0x10] sm:$0xf]
      %v186 = vld [vmem:[%s1 + $0x14] sm:$0xf]
      %v187 = vld [vmem:[%s1 + $0x18] sm:$0xf]
      %v188 = vld [vmem:[%s1 + $0x1c] sm:$0xf]
      %v189 = vld [vmem:[%s168] sm:$0x3]
      %v190 = vld [vmem:[%s168 + $0x2] sm:$0x3]
      %v191 = vld [vmem:[%s168 + $0x4] sm:$0x3]
      %v192 = vld [vmem:[%s168 + $0x6] sm:$0x3]
      %v198 = vunpack.c.l.s4 1966171168
      %v199 = vunpack.c.0.s8 %v198
      %v200 = vlaneseq
      %v201 = vshrl.u32 %v200, 7
      %v202 = vsub.s32 %v199, %v201
      %v203 = vrot.slane %v189, %v202
      %v204 = vcombine.high %v203, %v203
      %v206 = vunpack.c.l.s4 1966171168
      %v207 = vunpack.c.0.s8 %v206
      %v208 = vlaneseq
      %v209 = vshrl.u32 %v208, 7
      %v210 = vsub.s32 %v207, %v209
      %v211 = vrot.slane %v190, %v210
      %v212 = vcombine.high %v211, %v211
      %v214 = vunpack.c.l.s4 1966171168
      %v215 = vunpack.c.0.s8 %v214
      %v216 = vlaneseq
      %v217 = vshrl.u32 %v216, 7
      %v218 = vsub.s32 %v215, %v217
      %v219 = vrot.slane %v191, %v218
      %v220 = vcombine.high %v219, %v219
      %v222 = vunpack.c.l.s4 1966171168
      %v223 = vunpack.c.0.s8 %v222
      %v224 = vlaneseq
      %v225 = vshrl.u32 %v224, 7
      %v226 = vsub.s32 %v223, %v225
      %v227 = vrot.slane %v192, %v226
      %v228 = vcombine.high %v227, %v227
      %vm229 = vsmask.f32 256
      %vm230 = vsmask.f32 1284
      %vm231 = vmor %vm229, %vm230
      %vm232 = vsmask.f32 2312
      %vm233 = vmor %vm231, %vm232
      %vm234 = vsmask.f32 3340
      %vm235 = vmor %vm233, %vm234
      %vm236 = vsmask.f32 4368
      %vm237 = vmor %vm235, %vm236
      %vm238 = vsmask.f32 5396
      %vm239 = vmor %vm237, %vm238
      %vm240 = vsmask.f32 6424
      %vm241 = vmor %vm239, %vm240
      %vm242 = vsmask.f32 7452
      %vm243 = vmor %vm241, %vm242
      %v245 = vshrl.u32 %v203, 16
      %v247 = vrot.slane %v245, 7
      %v248 = vrot.slane %v247, 1
      %v250 = vshll.u32 %v204, 16
      %v252 = vsel %vm243, %v248, %v250
      %v254 = vshrl.u32 %v211, 16
      %v256 = vrot.slane %v254, 7
      %v257 = vrot.slane %v256, 1
      %v259 = vshll.u32 %v212, 16
      %v261 = vsel %vm243, %v257, %v259
      %v263 = vshrl.u32 %v219, 16
      %v265 = vrot.slane %v263, 7
      %v266 = vrot.slane %v265, 1
      %v268 = vshll.u32 %v220, 16
      %v270 = vsel %vm243, %v266, %v268
      %v272 = vshrl.u32 %v227, 16
      %v274 = vrot.slane %v272, 7
      %v275 = vrot.slane %v274, 1
      %v277 = vshll.u32 %v228, 16
      %v279 = vsel %vm243, %v275, %v277
      %s280 = scalar_lea.vmem %s1, 32
      %v281 = vld [vmem:[%s280] sm:$0xf]
      %v282 = vld [vmem:[%s280 + $0x4] sm:$0xf]
      %v283 = vld [vmem:[%s280 + $0x8] sm:$0xf]
      %v284 = vld [vmem:[%s280 + $0xc] sm:$0xf]
      %v285 = vld [vmem:[%s280 + $0x10] sm:$0xf]
      %v286 = vld [vmem:[%s280 + $0x14] sm:$0xf]
      %v287 = vld [vmem:[%s280 + $0x18] sm:$0xf]
      %v288 = vld [vmem:[%s280 + $0x1c] sm:$0xf]
      %v289 = vcombine.low %v252, %v261
      %v290 = vcombine.low %v270, %v279
      %v292 = vunpack.c.l.s4 1966171168
      %v293 = vunpack.c.0.s8 %v292
      %v294 = vlaneseq
      %v295 = vshrl.u32 %v294, 7
      %v296 = vsub.s32 %v293, %v295
      %v297 = vrot.slane %v289, %v296
      %v299 = vunpack.c.l.s4 1966171168
      %v300 = vunpack.c.0.s8 %v299
      %v301 = vlaneseq
      %v302 = vshrl.u32 %v301, 7
      %v303 = vsub.s32 %v300, %v302
      %v304 = vrot.slane %v290, %v303
      %v305 = vcombine.low %v297, %v304
      %v307 = vunpack.c.l.s4 1966171168
      %v308 = vunpack.c.0.s8 %v307
      %v309 = vlaneseq
      %v310 = vshrl.u32 %v309, 7
      %v311 = vsub.s32 %v308, %v310
      %v312 = vrot.slane %v305, %v311
      %v321 = vunpack.c.l.b16 %v281
      %v322 = vunpack.c.l.b16 %v282
      %v323 = vunpack.c.l.b16 %v283
      %v324 = vunpack.c.l.b16 %v284
      %v325 = vunpack.c.l.b16 %v285
      %v326 = vunpack.c.l.b16 %v286
      %v327 = vunpack.c.l.b16 %v287
      %v328 = vunpack.c.l.b16 %v288
      %v329 = vpack.c.b16 %v322, %v321
      %v330 = vpack.c.b16 %v324, %v323
      %v331 = vpack.c.b16 %v326, %v325
      %v332 = vpack.c.b16 %v328, %v327
      %vm337 = vcmask 523264
      %v339 = vsel %vm337, %v312, 0
      %341 = vmatprep.subr.bf16.mxu0 0
      %342 = vmatpush1.bf16.msra.mxu0 0
      %343 = vmatprep.subr.bf16.mxu0 0
      %344 = vmatpush1.bf16.msra.mxu0 0
      %345 = vmatprep.subr.bf16.mxu0 0
      %346 = vmatpush1.bf16.msra.mxu0 0
      %347 = vmatprep.subr.bf16.mxu0 0
      %348 = vmatpush1.bf16.msra.mxu0 0
      %349 = vmatprep.subr.bf16.mxu0 0
      %350 = vmatpush1.bf16.msra.mxu0 %v332
      %351 = vmatprep.subr.bf16.mxu0 0
      %352 = vmatpush1.bf16.msra.mxu0 %v331
      %353 = vmatprep.subr.bf16.mxu0 0
      %354 = vmatpush1.bf16.msra.mxu0 %v330
      %355 = vmatprep.subr.bf16.mxu0 0
      %356 = vmatpush1.bf16.msra.mxu0 %v329
      %357 = vmatprep.subr.bf16.mxu0 0
      %358 = vmatpush2.bf16.msra.mxu0 0
      %359 = vmatprep.subr.bf16.mxu0 0
      %360 = vmatpush2.bf16.msra.mxu0 0
      %361 = vmatprep.subr.bf16.mxu0 0
      %362 = vmatpush2.bf16.msra.mxu0 0
      %363 = vmatprep.subr.bf16.mxu0 0
      %364 = vmatpush2.bf16.msra.mxu0 0
      %365 = vmatprep.subr.bf16.mxu0 0
      %366 = vmatpush2.bf16.msra.mxu0 0
      %367 = vmatprep.subr.bf16.mxu0 0
      %368 = vmatpush2.bf16.msra.mxu0 0
      %369 = vmatprep.subr.bf16.mxu0 0
      %370 = vmatpush2.bf16.msra.mxu0 0
      %371 = vmatprep.subr.bf16.mxu0 0
      %372 = vmatpush2.bf16.msra.mxu0 0
      %373 = vmatprep.mubr.bf16.mxu0 0
      %374 = vmatmul.mubr.bf16.gmra.mxu0 %v339
      %v375 = vpop.f32.mrf.mxu0
      %v376 = vadd.f32 0.0, %v375
      %v377 = vpop.f32.mrf.mxu0
      %v378 = vpop.f32.mrf.mxu0
      %v379 = vpop.f32.mrf.mxu0
      %380 = vdwg.mxu0
      %v385 = vcombine.low %v177, %v178
      %v386 = vcombine.low %v179, %v180
      %v388 = vunpack.c.l.s4 1966171168
      %v389 = vunpack.c.0.s8 %v388
      %v390 = vlaneseq
      %v391 = vshrl.u32 %v390, 7
      %v392 = vsub.s32 %v389, %v391
      %v393 = vrot.slane %v385, %v392
      %v395 = vunpack.c.l.s4 1966171168
      %v396 = vunpack.c.0.s8 %v395
      %v397 = vlaneseq
      %v398 = vshrl.u32 %v397, 7
      %v399 = vsub.s32 %v396, %v398
      %v400 = vrot.slane %v386, %v399
      %v401 = vcombine.low %v393, %v400
      %v403 = vunpack.c.l.s4 1966171168
      %v404 = vunpack.c.0.s8 %v403
      %v405 = vlaneseq
      %v406 = vshrl.u32 %v405, 7
      %v407 = vsub.s32 %v404, %v406
      %v408 = vrot.slane %v401, %v407
      %v417 = vunpack.c.l.b16 %v181
      %v418 = vunpack.c.l.b16 %v182
      %v419 = vunpack.c.l.b16 %v183
      %v420 = vunpack.c.l.b16 %v184
      %v421 = vunpack.c.l.b16 %v185
      %v422 = vunpack.c.l.b16 %v186
      %v423 = vunpack.c.l.b16 %v187
      %v424 = vunpack.c.l.b16 %v188
      %v425 = vpack.c.b16 %v418, %v417
      %v426 = vpack.c.b16 %v420, %v419
      %v427 = vpack.c.b16 %v422, %v421
      %v428 = vpack.c.b16 %v424, %v423
      %v434 = vsel %vm337, %v408, 0
      %436 = vmatprep.subr.bf16.mxu0 0
      %437 = vmatpush1.bf16.msra.mxu0 0
      %438 = vmatprep.subr.bf16.mxu0 0
      %439 = vmatpush1.bf16.msra.mxu0 0
      %440 = vmatprep.subr.bf16.mxu0 0
      %441 = vmatpush1.bf16.msra.mxu0 0
      %442 = vmatprep.subr.bf16.mxu0 0
      %443 = vmatpush1.bf16.msra.mxu0 0
      %444 = vmatprep.subr.bf16.mxu0 0
      %445 = vmatpush1.bf16.msra.mxu0 %v428
      %446 = vmatprep.subr.bf16.mxu0 0
      %447 = vmatpush1.bf16.msra.mxu0 %v427
      %448 = vmatprep.subr.bf16.mxu0 0
      %449 = vmatpush1.bf16.msra.mxu0 %v426
      %450 = vmatprep.subr.bf16.mxu0 0
      %451 = vmatpush1.bf16.msra.mxu0 %v425
      %452 = vmatprep.subr.bf16.mxu0 0
      %453 = vmatpush2.bf16.msra.mxu0 0
      %454 = vmatprep.subr.bf16.mxu0 0
      %455 = vmatpush2.bf16.msra.mxu0 0
      %456 = vmatprep.subr.bf16.mxu0 0
      %457 = vmatpush2.bf16.msra.mxu0 0
      %458 = vmatprep.subr.bf16.mxu0 0
      %459 = vmatpush2.bf16.msra.mxu0 0
      %460 = vmatprep.subr.bf16.mxu0 0
      %461 = vmatpush2.bf16.msra.mxu0 0
      %462 = vmatprep.subr.bf16.mxu0 0
      %463 = vmatpush2.bf16.msra.mxu0 0
      %464 = vmatprep.subr.bf16.mxu0 0
      %465 = vmatpush2.bf16.msra.mxu0 0
      %466 = vmatprep.subr.bf16.mxu0 0
      %467 = vmatpush2.bf16.msra.mxu0 0
      %468 = vmatprep.mubr.bf16.mxu0 0
      %469 = vmatmul.mubr.bf16.gmra.mxu0 %v434
      %v470 = vpop.f32.mrf.mxu0
      %v471 = vadd.f32 %v376, %v470
      %v472 = vpop.f32.mrf.mxu0
      %v473 = vpop.f32.mrf.mxu0
      %v474 = vpop.f32.mrf.mxu0
      %475 = vdwg.mxu0
      %s476 = scalar_lea.vmem %s168, 2
      %v477 = vld [vmem:[%s476] sm:$0x1]
      %v478 = vld [vmem:[%s476 + $0x2] sm:$0x1]
      %v479 = vld [vmem:[%s476 + $0x4] sm:$0x1]
      %v480 = vld [vmem:[%s476 + $0x6] sm:$0x1]
      %s481 = scalar_lea.vmem %s1, 64
      %v482 = vld [vmem:[%s481] sm:$0xf]
      %v483 = vld [vmem:[%s481 + $0x4] sm:$0xf]
      %v484 = vld [vmem:[%s481 + $0x8] sm:$0xf]
      %v485 = vld [vmem:[%s481 + $0xc] sm:$0xf]
      %v486 = vld [vmem:[%s481 + $0x10] sm:$0xf]
      %v487 = vld [vmem:[%s481 + $0x14] sm:$0xf]
      %v488 = vld [vmem:[%s481 + $0x18] sm:$0xf]
      %v489 = vld [vmem:[%s481 + $0x1c] sm:$0xf]
      %v494 = vcombine.low %v477, %v478
      %v495 = vcombine.low %v479, %v480
      %v497 = vunpack.c.l.s4 1966171168
      %v498 = vunpack.c.0.s8 %v497
      %v499 = vlaneseq
      %v500 = vshrl.u32 %v499, 7
      %v501 = vsub.s32 %v498, %v500
      %v502 = vrot.slane %v494, %v501
      %v504 = vunpack.c.l.s4 1966171168
      %v505 = vunpack.c.0.s8 %v504
      %v506 = vlaneseq
      %v507 = vshrl.u32 %v506, 7
      %v508 = vsub.s32 %v505, %v507
      %v509 = vrot.slane %v495, %v508
      %v510 = vcombine.low %v502, %v509
      %v512 = vunpack.c.l.s4 1966171168
      %v513 = vunpack.c.0.s8 %v512
      %v514 = vlaneseq
      %v515 = vshrl.u32 %v514, 7
      %v516 = vsub.s32 %v513, %v515
      %v517 = vrot.slane %v510, %v516
      %v526 = vunpack.c.l.b16 %v482
      %v527 = vunpack.c.l.b16 %v483
      %v528 = vunpack.c.l.b16 %v484
      %v529 = vunpack.c.l.b16 %v485
      %v530 = vunpack.c.l.b16 %v486
      %v531 = vunpack.c.l.b16 %v487
      %v532 = vunpack.c.l.b16 %v488
      %v533 = vunpack.c.l.b16 %v489
      %v534 = vpack.c.b16 %v527, %v526
      %v535 = vpack.c.b16 %v529, %v528
      %v536 = vpack.c.b16 %v531, %v530
      %v537 = vpack.c.b16 %v533, %v532
      %v543 = vsel %vm337, %v517, 0
      %545 = vmatprep.subr.bf16.mxu0 0
      %546 = vmatpush1.bf16.msra.mxu0 0
      %547 = vmatprep.subr.bf16.mxu0 0
      %548 = vmatpush1.bf16.msra.mxu0 0
      %549 = vmatprep.subr.bf16.mxu0 0
      %550 = vmatpush1.bf16.msra.mxu0 0
      %551 = vmatprep.subr.bf16.mxu0 0
      %552 = vmatpush1.bf16.msra.mxu0 0
      %553 = vmatprep.subr.bf16.mxu0 0
      %554 = vmatpush1.bf16.msra.mxu0 %v537
      %555 = vmatprep.subr.bf16.mxu0 0
      %556 = vmatpush1.bf16.msra.mxu0 %v536
      %557 = vmatprep.subr.bf16.mxu0 0
      %558 = vmatpush1.bf16.msra.mxu0 %v535
      %559 = vmatprep.subr.bf16.mxu0 0
      %560 = vmatpush1.bf16.msra.mxu0 %v534
      %561 = vmatprep.subr.bf16.mxu0 0
      %562 = vmatpush2.bf16.msra.mxu0 0
      %563 = vmatprep.subr.bf16.mxu0 0
      %564 = vmatpush2.bf16.msra.mxu0 0
      %565 = vmatprep.subr.bf16.mxu0 0
      %566 = vmatpush2.bf16.msra.mxu0 0
      %567 = vmatprep.subr.bf16.mxu0 0
      %568 = vmatpush2.bf16.msra.mxu0 0
      %569 = vmatprep.subr.bf16.mxu0 0
      %570 = vmatpush2.bf16.msra.mxu0 0
      %571 = vmatprep.subr.bf16.mxu0 0
      %572 = vmatpush2.bf16.msra.mxu0 0
      %573 = vmatprep.subr.bf16.mxu0 0
      %574 = vmatpush2.bf16.msra.mxu0 0
      %575 = vmatprep.subr.bf16.mxu0 0
      %576 = vmatpush2.bf16.msra.mxu0 0
      %577 = vmatprep.mubr.bf16.mxu0 0
      %578 = vmatmul.mubr.bf16.gmra.mxu0 %v543
      %v579 = vpop.f32.mrf.mxu0
      %v580 = vadd.f32 0.0, %v579
      %v581 = vpop.f32.mrf.mxu0
      %v582 = vpop.f32.mrf.mxu0
      %v583 = vpop.f32.mrf.mxu0
      %584 = vdwg.mxu0
      %v585 = vadd.f32 %v471, %v580
      %v586 = vld [vmem:[%s476] sm:$0x3]
      %v587 = vld [vmem:[%s476 + $0x2] sm:$0x3]
      %v588 = vld [vmem:[%s476 + $0x4] sm:$0x3]
      %v589 = vld [vmem:[%s476 + $0x6] sm:$0x3]
      %v595 = vunpack.c.l.s4 1966171168
      %v596 = vunpack.c.0.s8 %v595
      %v597 = vlaneseq
      %v598 = vshrl.u32 %v597, 7
      %v599 = vsub.s32 %v596, %v598
      %v600 = vrot.slane %v586, %v599
      %v601 = vcombine.high %v600, %v600
      %v603 = vunpack.c.l.s4 1966171168
      %v604 = vunpack.c.0.s8 %v603
      %v605 = vlaneseq
      %v606 = vshrl.u32 %v605, 7
      %v607 = vsub.s32 %v604, %v606
      %v608 = vrot.slane %v587, %v607
      %v609 = vcombine.high %v608, %v608
      %v611 = vunpack.c.l.s4 1966171168
      %v612 = vunpack.c.0.s8 %v611
      %v613 = vlaneseq
      %v614 = vshrl.u32 %v613, 7
      %v615 = vsub.s32 %v612, %v614
      %v616 = vrot.slane %v588, %v615
      %v617 = vcombine.high %v616, %v616
      %v619 = vunpack.c.l.s4 1966171168
      %v620 = vunpack.c.0.s8 %v619
      %v621 = vlaneseq
      %v622 = vshrl.u32 %v621, 7
      %v623 = vsub.s32 %v620, %v622
      %v624 = vrot.slane %v589, %v623
      %v625 = vcombine.high %v624, %v624
      %v627 = vshrl.u32 %v600, 16
      %v629 = vrot.slane %v627, 7
      %v630 = vrot.slane %v629, 1
      %v632 = vshll.u32 %v601, 16
      %v634 = vsel %vm243, %v630, %v632
      %v636 = vshrl.u32 %v608, 16
      %v638 = vrot.slane %v636, 7
      %v639 = vrot.slane %v638, 1
      %v641 = vshll.u32 %v609, 16
      %v643 = vsel %vm243, %v639, %v641
      %v645 = vshrl.u32 %v616, 16
      %v647 = vrot.slane %v645, 7
      %v648 = vrot.slane %v647, 1
      %v650 = vshll.u32 %v617, 16
      %v652 = vsel %vm243, %v648, %v650
      %v654 = vshrl.u32 %v624, 16
      %v656 = vrot.slane %v654, 7
      %v657 = vrot.slane %v656, 1
      %v659 = vshll.u32 %v625, 16
      %v661 = vsel %vm243, %v657, %v659
      %s662 = scalar_lea.vmem %s1, 96
      %v663 = vld [vmem:[%s662] sm:$0xf]
      %v664 = vld [vmem:[%s662 + $0x4] sm:$0xf]
      %v665 = vld [vmem:[%s662 + $0x8] sm:$0xf]
      %v666 = vld [vmem:[%s662 + $0xc] sm:$0xf]
      %v667 = vld [vmem:[%s662 + $0x10] sm:$0xf]
      %v668 = vld [vmem:[%s662 + $0x14] sm:$0xf]
      %v669 = vld [vmem:[%s662 + $0x18] sm:$0xf]
      %v670 = vld [vmem:[%s662 + $0x1c] sm:$0xf]
      %v671 = vcombine.low %v634, %v643
      %v672 = vcombine.low %v652, %v661
      %v674 = vunpack.c.l.s4 1966171168
      %v675 = vunpack.c.0.s8 %v674
      %v676 = vlaneseq
      %v677 = vshrl.u32 %v676, 7
      %v678 = vsub.s32 %v675, %v677
      %v679 = vrot.slane %v671, %v678
      %v681 = vunpack.c.l.s4 1966171168
      %v682 = vunpack.c.0.s8 %v681
      %v683 = vlaneseq
      %v684 = vshrl.u32 %v683, 7
      %v685 = vsub.s32 %v682, %v684
      %v686 = vrot.slane %v672, %v685
      %v687 = vcombine.low %v679, %v686
      %v689 = vunpack.c.l.s4 1966171168
      %v690 = vunpack.c.0.s8 %v689
      %v691 = vlaneseq
      %v692 = vshrl.u32 %v691, 7
      %v693 = vsub.s32 %v690, %v692
      %v694 = vrot.slane %v687, %v693
      %v703 = vunpack.c.l.b16 %v663
      %v704 = vunpack.c.l.b16 %v664
      %v705 = vunpack.c.l.b16 %v665
      %v706 = vunpack.c.l.b16 %v666
      %v707 = vunpack.c.l.b16 %v667
      %v708 = vunpack.c.l.b16 %v668
      %v709 = vunpack.c.l.b16 %v669
      %v710 = vunpack.c.l.b16 %v670
      %v711 = vpack.c.b16 %v704, %v703
      %v712 = vpack.c.b16 %v706, %v705
      %v713 = vpack.c.b16 %v708, %v707
      %v714 = vpack.c.b16 %v710, %v709
      %v720 = vsel %vm337, %v694, 0
      %722 = vmatprep.subr.bf16.mxu0 0
      %723 = vmatpush1.bf16.msra.mxu0 0
      %724 = vmatprep.subr.bf16.mxu0 0
      %725 = vmatpush1.bf16.msra.mxu0 0
      %726 = vmatprep.subr.bf16.mxu0 0
      %727 = vmatpush1.bf16.msra.mxu0 0
      %728 = vmatprep.subr.bf16.mxu0 0
      %729 = vmatpush1.bf16.msra.mxu0 0
      %730 = vmatprep.subr.bf16.mxu0 0
      %731 = vmatpush1.bf16.msra.mxu0 %v714
      %732 = vmatprep.subr.bf16.mxu0 0
      %733 = vmatpush1.bf16.msra.mxu0 %v713
      %734 = vmatprep.subr.bf16.mxu0 0
      %735 = vmatpush1.bf16.msra.mxu0 %v712
      %736 = vmatprep.subr.bf16.mxu0 0
      %737 = vmatpush1.bf16.msra.mxu0 %v711
      %738 = vmatprep.subr.bf16.mxu0 0
      %739 = vmatpush2.bf16.msra.mxu0 0
      %740 = vmatprep.subr.bf16.mxu0 0
      %741 = vmatpush2.bf16.msra.mxu0 0
      %742 = vmatprep.subr.bf16.mxu0 0
      %743 = vmatpush2.bf16.msra.mxu0 0
      %744 = vmatprep.subr.bf16.mxu0 0
      %745 = vmatpush2.bf16.msra.mxu0 0
      %746 = vmatprep.subr.bf16.mxu0 0
      %747 = vmatpush2.bf16.msra.mxu0 0
      %748 = vmatprep.subr.bf16.mxu0 0
      %749 = vmatpush2.bf16.msra.mxu0 0
      %750 = vmatprep.subr.bf16.mxu0 0
      %751 = vmatpush2.bf16.msra.mxu0 0
      %752 = vmatprep.subr.bf16.mxu0 0
      %753 = vmatpush2.bf16.msra.mxu0 0
      %754 = vmatprep.mubr.bf16.mxu0 0
      %755 = vmatmul.mubr.bf16.gmra.mxu0 %v720
      %v756 = vpop.f32.mrf.mxu0
      %v757 = vadd.f32 0.0, %v756
      %v758 = vpop.f32.mrf.mxu0
      %v759 = vpop.f32.mrf.mxu0
      %v760 = vpop.f32.mrf.mxu0
      %761 = vdwg.mxu0
      %v762 = vadd.f32 %v585, %v757
      %vm763 = vcmp.gt.f32.partialorder %v762, 0.0
      %v764 = vmul.f32 %v762, 0.01
      %v765 = vsel %vm763, %v762, %v764
      %vm766 = vcmask 130048
      %767 = vst.msk [vmem:[%s175] sm:$0xff] %vm766, %v765
      %p768 = scmp.lt.s32.totalorder %s17, 1
      %s769 = scalar_select %p768, %s17, 1
      %p770 = scmp.lt.s32.totalorder %s18, 0
      %s771 = scalar_select %p770, %s18, 0
      %s772 = sadd.s32 %s771, %s769
      %s773 = smul.addr %s772, 8
      %s774 = scalar_lea.vmem %s2, %s773
      // Predicated region
      $region29: #{down_sequence_forward.5} parent=27 // pred_check
        %p775 = pneg %p94
      $region30: #{down_sequence_forward.5} parent=27 // pred_check_branch
        %777 = sbr.rel (%p775) target = $region32
      $region31: #{down_sequence_forward.5} parent=27 // pred_region
        _
      $region32: #{down_sequence_forward.5} parent=27 // pred_fallthru
        _
    $region28: #{down_sequence_forward.5} parent=5 // pred_fallthru
      _
    %p778 = scmp.le.s32.totalorder 2, %s8
    // Predicated region
    $region33: #{down_sequence_forward.5} parent=5 // pred_check
      %p779 = pneg %p778
    $region34: #{down_sequence_forward.5} parent=5 // pred_check_branch
      %781 = sbr.rel (%p779) target = $region36
    $region35: #{down_sequence_forward.5} parent=5 // pred_region
      %s782 = ssub.s32 %s8, 2
      // Predicated region
      $region37: #{down_sequence_forward.5} parent=35 // pred_check
        %p783 = pneg %p100
      $region38: #{down_sequence_forward.5} parent=35 // pred_check_branch
        %785 = sbr.rel (%p783) target = $region40
      $region39: #{down_sequence_forward.5} parent=35 // pred_region
        %p786 = scmp.lt.s32.totalorder %s19, 1
        %s787 = scalar_select %p786, %s19, 1
        %p788 = scmp.lt.s32.totalorder %s20, 0
        %s789 = scalar_select %p788, %s20, 0
        %s790 = sadd.s32 %s789, %s787
        %s791 = smul.addr %s790, 8
        %s792 = scalar_lea.vmem %s2, %s791
      $region40: #{down_sequence_forward.5} parent=35 // pred_fallthru
        _
    $region36: #{down_sequence_forward.5} parent=5 // pred_fallthru
      _
  $region6: #{down_sequence_forward.5} parent=0 // loop_footer
    %s12 = sadd.s32 1, %s8
  $region7: #{down_sequence_forward.5} parent=0 // loop_footer_branch
    %7 = sbr.rel target = $region3
  $region8: #{down_sequence_forward.5} parent=0 // loop_exit
    _

</llo_original>
